<compile_context>
chip_gen: v6e
topology: v6e:2x2x1
jax: 0.10.0
libtpu: 0.0.40
codegen_flags: <defaults>
</compile_context>

<pallas_src>
import functools
import math

import jax
import jax.numpy as jnp
from jax.experimental import pallas as pl
from jax.experimental.pallas import tpu as pltpu


# ---------------------------------------------------------------------------
# Fused kernel: full IGNNK forward (all batches) in one invocation.
# Layout: activations are kept transposed and batch-collapsed, (B*C, N_pad),
# features/batch on sublanes, nodes on lanes.
# ---------------------------------------------------------------------------
def _ignnk_fused_kernel(x_ref, aqt_ref, aht_ref,
                        t1_ref, b1_ref, t2_ref, b2_ref, t3_ref, b3_ref,
                        out_ref, *, orders, final_activation, compute_dtype):
    aqt = aqt_ref[...]          # A_q^T : (N_pad, N_pad), compute_dtype
    aht = aht_ref[...]          # A_h^T : (N_pad, N_pad), compute_dtype

    def chebyshev_stack(state):
        # state : (R, N_pad) f32  (R = B * C_in, batch-major rows)
        # Returns the concatenated stack [x_0; x_1; ...; x_{M-1}], (M*R, N_pad) f32.
        # x0 intentionally carries over from the A_q chain into the A_h chain
        # (matches the PyTorch loop, which never resets x0).
        xs = [state]
        x0 = state
        for a_t in (aqt, aht):                     # supports = [A_q, A_h]
            x1 = jnp.dot(x0.astype(compute_dtype), a_t,
                         preferred_element_type=jnp.float32)
            xs.append(x1)
            for _ in range(2, orders + 1):         # Chebyshev recursion
                x2 = 2.0 * jnp.dot(x1.astype(compute_dtype), a_t,
                                   preferred_element_type=jnp.float32) - x0
                xs.append(x2)
                x1, x0 = x2, x1
        return jnp.concatenate(xs, axis=0)

    def d_gcn(state, t_ref, b_ref, act):
        # One merged dense matmul per layer:
        #   t_ref : block-diagonal folded Theta^T, (B*C_out, M*B*C_in), compute_dtype
        #   b_ref : batch-tiled bias, (B*C_out, 1), f32
        stack = chebyshev_stack(state)                                 # (M*B*Cin, Np) f32
        acc = jnp.dot(t_ref[...], stack.astype(compute_dtype),
                      preferred_element_type=jnp.float32)              # (B*Cout, Np) f32
        acc = acc + b_ref[...]                                         # lane broadcast
        if act == 'relu':
            acc = jnp.maximum(acc, 0.0)
        return acc

    s0 = x_ref[...]                                   # (B*F, N_pad) f32
    h1 = d_gcn(s0, t1_ref, b1_ref, 'relu')            # (B*z, N_pad)
    h2 = d_gcn(h1, t2_ref, b2_ref, 'relu') + h1       # residual
    h3 = d_gcn(h2, t3_ref, b3_ref, final_activation)  # (B*h, N_pad)
    out_ref[...] = h3.astype(out_ref.dtype)


# ---------------------------------------------------------------------------
# Wrapper (host-side parameter folding + padding + pallas_call)
# ---------------------------------------------------------------------------
def ignnk_forward(params, X, A_q, A_h, A_q_ignored=None, A_h_ignored=None,
                  *, k, activation, compute_dtype=jnp.bfloat16,
                  lane_multiple=128):
    """X: (B, num_features, N) -> (B, h, N).  Mirrors IGNNK.forward."""
    if activation not in ('relu', 'linear'):
        raise ValueError(f'Activation {activation} not supported.')

    B, num_features, N = X.shape
    t1, b1 = params['GNN1']
    t2, b2 = params['GNN2']
    t3, b3 = params['GNN3']
    z = t1.shape[1]
    h = t3.shape[1]
    m = 2 * k + 1

    # Lane-dense node dimension (pad to a multiple of 128; on v6e/v7x a
    # multiple of 256 would also match the MXU native tile).
    n_pad = ((N + lane_multiple - 1) // lane_multiple) * lane_multiple

    # --- activations / adjacency ------------------------------------------
    # state rows are batch-major: row = b*C + c, so (B, F, N) flattens directly.
    x2d = jnp.pad(X.astype(jnp.float32).reshape(B * num_features, N),
                  ((0, 0), (0, n_pad - N)))

    def prep_adj(A):
        At = A.astype(jnp.float32).T
        At = jnp.pad(At, ((0, n_pad - N), (0, n_pad - N)))
        return At.astype(compute_dtype)

    aqt = prep_adj(A_q)
    aht = prep_adj(A_h)

    # --- parameters: fold Theta to block-diagonal (B*O, M*B*C) -------------
    # PyTorch dense uses x[b, n, c*M + m] @ Theta1[c*M + m, o]; our stack rows
    # are ordered (m, b, c), so Theta_bd[b*O + o, m*B*C + b*C + c] = Theta1[c*M+m, o].
    eye_b = jnp.eye(B, dtype=jnp.float32)

    def fold_theta_bd(theta, c_in):
        o = theta.shape[1]
        fold = theta.astype(jnp.float32).reshape(c_in, m, o).transpose(2, 1, 0)  # (o, m, c)
        bd = jnp.einsum('omc,bd->bomdc', fold, eye_b)                            # (B,o,m,B,c)
        return bd.reshape(B * o, m * B * c_in).astype(compute_dtype)

    def fold_bias(bias):
        o = bias.shape[0]
        return jnp.tile(bias.astype(jnp.float32), B).reshape(B * o, 1)

    t1f = fold_theta_bd(t1, num_features)   # (B*z, m*B*F)
    t2f = fold_theta_bd(t2, z)              # (B*z, m*B*z)
    t3f = fold_theta_bd(t3, z)              # (B*h, m*B*z)
    b1c = fold_bias(b1)                     # (B*z, 1)
    b2c = fold_bias(b2)
    b3c = fold_bias(b3)                     # (B*h, 1)

    kern = functools.partial(_ignnk_fused_kernel, orders=k,
                             final_activation=activation,
                             compute_dtype=compute_dtype)

    def full_spec(shape):
        return pl.BlockSpec(shape, lambda *_: (0,) * len(shape))

    out2d = pl.pallas_call(
        kern,
        out_shape=jax.ShapeDtypeStruct((B * h, n_pad), jnp.float32),
        grid=(1,),                                   # batch collapsed: one step
        in_specs=[
            full_spec((B * num_features, n_pad)),    # X (transposed, batch-major)
            full_spec((n_pad, n_pad)),               # A_q^T
            full_spec((n_pad, n_pad)),               # A_h^T
            full_spec((B * z, m * B * num_features)),  # Theta1 (block-diag folded)
            full_spec((B * z, 1)),                   # bias1 (batch-tiled)
            full_spec((B * z, m * B * z)),           # Theta2
            full_spec((B * z, 1)),                   # bias2
            full_spec((B * h, m * B * z)),           # Theta3
            full_spec((B * h, 1)),                   # bias3
        ],
        out_specs=full_spec((B * h, n_pad)),         # lane-dense output block
        compiler_params=pltpu.CompilerParams(
            dimension_semantics=("arbitrary",),
            vmem_limit_bytes=32 * 1024 * 1024),
    )(x2d, aqt, aht, t1f, b1c, t2f, b2c, t3f, b3c)

    # (B*h, N_pad) -> (B, h, N)
    return out2d.reshape(B, h, n_pad)[:, :, :N]


# ---------------------------------------------------------------------------
# Pure-JAX reference (mirrors the PyTorch module op-for-op) for validation.
# ---------------------------------------------------------------------------
def _dgcn_reference(X_bnc, A_q, A_h, theta, bias, orders, activation):
    B, N, C = X_bnc.shape
    x0 = jnp.transpose(X_bnc.astype(jnp.float32), (1, 2, 0)).reshape(N, C * B)
    xs = [x0]
    for support in (A_q, A_h):
        x1 = support @ x0
        xs.append(x1)
        for _ in range(2, orders + 1):
            x2 = 2.0 * (support @ x1) - x0
            xs.append(x2)
            x1, x0 = x2, x1
    M = 2 * orders + 1
    x = jnp.stack(xs, axis=0).reshape(M, N, C, B)
    x = jnp.transpose(x, (3, 1, 2, 0)).reshape(B, N, C * M)
    y = x @ theta + bias
    if activation == 'relu':
        y = jnp.maximum(y, 0.0)
    return y


def ignnk_reference(params, X, A_q, A_h, *, k, activation):
    X_S = jnp.transpose(X.astype(jnp.float32), (0, 2, 1))     # (B, N, F)
    t1, b1 = params['GNN1']
    t2, b2 = params['GNN2']
    t3, b3 = params['GNN3']
    s1 = _dgcn_reference(X_S, A_q, A_h, t1, b1, k, 'relu')
    s2 = _dgcn_reference(s1, A_q, A_h, t2, b2, k, 'relu') + s1
    s3 = _dgcn_reference(s2, A_q, A_h, t3, b3, k, activation)
    return jnp.transpose(s3, (0, 2, 1))                       # (B, h, N)


# ---------------------------------------------------------------------------
# Parameter init (matches D_GCN.reset_parameters)
# ---------------------------------------------------------------------------
def init_params(key, h, z, k, num_features):
    m = 2 * k + 1

    def dgcn_params(key, cin, cout):
        k1, k2 = jax.random.split(key)
        stdv = 1.0 / math.sqrt(cout)
        theta = jax.random.uniform(k1, (cin * m, cout), jnp.float32, -stdv, stdv)
        bias = jax.random.uniform(k2, (cout,), jnp.float32, -stdv, stdv)
        return theta, bias

    k1, k2, k3 = jax.random.split(key, 3)
    return {
        'GNN1': dgcn_params(k1, num_features, z),
        'GNN2': dgcn_params(k2, z, z),
        'GNN3': dgcn_params(k3, z, h),
    }


if __name__ == "__main__":
    # Small shapes consistent with the module's forward.
    B, N = 2, 16                          # batch, num_nodes
    h, z, k, num_features = 8, 32, 2, 8   # time dim, hidden dim, order, features
    activation = 'relu'

    key = jax.random.PRNGKey(0)
    kp, kx, ka, kb = jax.random.split(key, 4)
    params = init_params(kp, h, z, k, num_features)

    X = jax.random.normal(kx, (B, num_features, N), jnp.float32)
    A_q = jax.random.uniform(ka, (N, N), jnp.float32)
    A_q = A_q / jnp.sum(A_q, axis=1, keepdims=True)   # forward random-walk matrix
    A_h = jax.random.uniform(kb, (N, N), jnp.float32)
    A_h = A_h / jnp.sum(A_h, axis=1, keepdims=True)   # backward random-walk matrix

    # Exact-parity mode (f32 MXU operands) checked against the pure-JAX reference.
    fwd_f32 = jax.jit(functools.partial(ignnk_forward, k=k, activation=activation,
                                        compute_dtype=jnp.float32))
    out_f32 = fwd_f32(params, X, A_q, A_h, A_q, A_h)
    jax.block_until_ready(out_f32)
    ref = ignnk_reference(params, X, A_q, A_h, k=k, activation=activation)
    assert out_f32.shape == (B, h, N), out_f32.shape
    assert bool(jnp.allclose(out_f32, ref, atol=1e-3, rtol=1e-3)), \
        float(jnp.max(jnp.abs(out_f32 - ref)))

    # Fast mode (bf16 MXU operands, f32 accumulation/carries) — default.
    fwd = jax.jit(functools.partial(ignnk_forward, k=k, activation=activation))
    out = fwd(params, X, A_q, A_h, A_q, A_h)
    jax.block_until_ready(out)
    assert out.shape == (B, h, N), out.shape
    assert out.dtype == jnp.float32
    print("KERNEL_OK")
</pallas_src>

<mosaic_0001>
module attributes {stable_mosaic.version = 11 : i64} {
  func.func @_ignnk_fused_kernel(%arg0: i32, %arg1: memref<16x128xf32, #tpu.memory_space<vmem>>, %arg2: memref<128x128xf32, #tpu.memory_space<vmem>>, %arg3: memref<128x128xf32, #tpu.memory_space<vmem>>, %arg4: memref<64x80xf32, #tpu.memory_space<vmem>>, %arg5: memref<64x1xf32, #tpu.memory_space<vmem>>, %arg6: memref<64x320xf32, #tpu.memory_space<vmem>>, %arg7: memref<64x1xf32, #tpu.memory_space<vmem>>, %arg8: memref<16x320xf32, #tpu.memory_space<vmem>>, %arg9: memref<16x1xf32, #tpu.memory_space<vmem>>, %arg10: memref<16x128xf32, #tpu.memory_space<vmem>>) attributes {dimension_semantics = [#tpu.dimension_semantics<arbitrary>], iteration_bounds = array<i64: 1>, scalar_prefetch = 0 : i64, scratch_operands = 0 : i64, tpu.core_type = #tpu.core_type<tc>, window_params = [{pipeline_mode = #tpu.pipeline_mode<synchronous>, transform_indices = @transform_0, window_bounds = array<i64: 16, 128>}, {pipeline_mode = #tpu.pipeline_mode<synchronous>, transform_indices = @transform_1, window_bounds = array<i64: 128, 128>}, {pipeline_mode = #tpu.pipeline_mode<synchronous>, transform_indices = @transform_2, window_bounds = array<i64: 128, 128>}, {pipeline_mode = #tpu.pipeline_mode<synchronous>, transform_indices = @transform_3, window_bounds = array<i64: 64, 80>}, {pipeline_mode = #tpu.pipeline_mode<synchronous>, transform_indices = @transform_4, window_bounds = array<i64: 64, 1>}, {pipeline_mode = #tpu.pipeline_mode<synchronous>, transform_indices = @transform_5, window_bounds = array<i64: 64, 320>}, {pipeline_mode = #tpu.pipeline_mode<synchronous>, transform_indices = @transform_6, window_bounds = array<i64: 64, 1>}, {pipeline_mode = #tpu.pipeline_mode<synchronous>, transform_indices = @transform_7, window_bounds = array<i64: 16, 320>}, {pipeline_mode = #tpu.pipeline_mode<synchronous>, transform_indices = @transform_8, window_bounds = array<i64: 16, 1>}, {pipeline_mode = #tpu.pipeline_mode<synchronous>, transform_indices = @transform_9, window_bounds = array<i64: 16, 128>}]} {
    %c0 = arith.constant 0 : index
    %c0_0 = arith.constant 0 : index
    %0 = vector.load %arg2[%c0, %c0_0] : memref<128x128xf32, #tpu.memory_space<vmem>>, vector<128x128xf32>
    %c0_1 = arith.constant 0 : index
    %c0_2 = arith.constant 0 : index
    %1 = vector.load %arg3[%c0_1, %c0_2] : memref<128x128xf32, #tpu.memory_space<vmem>>, vector<128x128xf32>
    %c0_3 = arith.constant 0 : index
    %c0_4 = arith.constant 0 : index
    %2 = vector.load %arg1[%c0_3, %c0_4] : memref<16x128xf32, #tpu.memory_space<vmem>>, vector<16x128xf32>
    %cst = arith.constant dense<0.000000e+00> : vector<16x128xf32>
    %3 = tpu.matmul %2, %0, %cst {dimension_numbers = #tpu.dot_dimension_numbers<[1], [0], [0], [1], [0, 0, 1, 1], [], []>} : vector<16x128xf32>, vector<128x128xf32>, vector<16x128xf32> -> vector<16x128xf32>
    %cst_5 = arith.constant dense<0.000000e+00> : vector<16x128xf32>
    %4 = tpu.matmul %3, %0, %cst_5 {dimension_numbers = #tpu.dot_dimension_numbers<[1], [0], [0], [1], [0, 0, 1, 1], [], []>} : vector<16x128xf32>, vector<128x128xf32>, vector<16x128xf32> -> vector<16x128xf32>
    %cst_6 = arith.constant 2.000000e+00 : f32
    %5 = vector.broadcast %cst_6 : f32 to vector<16x128xf32>
    %6 = arith.mulf %5, %4 : vector<16x128xf32>
    %7 = arith.subf %6, %2 : vector<16x128xf32>
    %cst_7 = arith.constant dense<0.000000e+00> : vector<16x128xf32>
    %8 = tpu.matmul %3, %1, %cst_7 {dimension_numbers = #tpu.dot_dimension_numbers<[1], [0], [0], [1], [0, 0, 1, 1], [], []>} : vector<16x128xf32>, vector<128x128xf32>, vector<16x128xf32> -> vector<16x128xf32>
    %cst_8 = arith.constant dense<0.000000e+00> : vector<16x128xf32>
    %9 = tpu.matmul %8, %1, %cst_8 {dimension_numbers = #tpu.dot_dimension_numbers<[1], [0], [0], [1], [0, 0, 1, 1], [], []>} : vector<16x128xf32>, vector<128x128xf32>, vector<16x128xf32> -> vector<16x128xf32>
    %cst_9 = arith.constant 2.000000e+00 : f32
    %10 = vector.broadcast %cst_9 : f32 to vector<16x128xf32>
    %11 = arith.mulf %10, %9 : vector<16x128xf32>
    %12 = arith.subf %11, %3 : vector<16x128xf32>
    %13 = tpu.concatenate %2, %3, %7, %8, %12 in 0 : vector<16x128xf32>, vector<16x128xf32>, vector<16x128xf32>, vector<16x128xf32>, vector<16x128xf32> -> vector<80x128xf32>
    %c0_10 = arith.constant 0 : index
    %c0_11 = arith.constant 0 : index
    %14 = vector.load %arg4[%c0_10, %c0_11] : memref<64x80xf32, #tpu.memory_space<vmem>>, vector<64x80xf32>
    %cst_12 = arith.constant dense<0.000000e+00> : vector<64x128xf32>
    %15 = tpu.matmul %14, %13, %cst_12 {dimension_numbers = #tpu.dot_dimension_numbers<[1], [0], [0], [1], [0, 0, 1, 1], [], []>} : vector<64x80xf32>, vector<80x128xf32>, vector<64x128xf32> -> vector<64x128xf32>
    %c0_13 = arith.constant 0 : index
    %c0_14 = arith.constant 0 : index
    %16 = vector.load %arg5[%c0_13, %c0_14] : memref<64x1xf32, #tpu.memory_space<vmem>>, vector<64x1xf32>
    %17 = vector.broadcast %16 : vector<64x1xf32> to vector<64x128xf32>
    %18 = arith.addf %15, %17 : vector<64x128xf32>
    %cst_15 = arith.constant 0.000000e+00 : f32
    %19 = vector.broadcast %cst_15 : f32 to vector<64x128xf32>
    %20 = arith.maximumf %18, %19 : vector<64x128xf32>
    %cst_16 = arith.constant dense<0.000000e+00> : vector<64x128xf32>
    %21 = tpu.matmul %20, %0, %cst_16 {dimension_numbers = #tpu.dot_dimension_numbers<[1], [0], [0], [1], [0, 0, 1, 1], [], []>} : vector<64x128xf32>, vector<128x128xf32>, vector<64x128xf32> -> vector<64x128xf32>
    %cst_17 = arith.constant dense<0.000000e+00> : vector<64x128xf32>
    %22 = tpu.matmul %21, %0, %cst_17 {dimension_numbers = #tpu.dot_dimension_numbers<[1], [0], [0], [1], [0, 0, 1, 1], [], []>} : vector<64x128xf32>, vector<128x128xf32>, vector<64x128xf32> -> vector<64x128xf32>
    %cst_18 = arith.constant 2.000000e+00 : f32
    %23 = vector.broadcast %cst_18 : f32 to vector<64x128xf32>
    %24 = arith.mulf %23, %22 : vector<64x128xf32>
    %25 = arith.subf %24, %20 : vector<64x128xf32>
    %cst_19 = arith.constant dense<0.000000e+00> : vector<64x128xf32>
    %26 = tpu.matmul %21, %1, %cst_19 {dimension_numbers = #tpu.dot_dimension_numbers<[1], [0], [0], [1], [0, 0, 1, 1], [], []>} : vector<64x128xf32>, vector<128x128xf32>, vector<64x128xf32> -> vector<64x128xf32>
    %cst_20 = arith.constant dense<0.000000e+00> : vector<64x128xf32>
    %27 = tpu.matmul %26, %1, %cst_20 {dimension_numbers = #tpu.dot_dimension_numbers<[1], [0], [0], [1], [0, 0, 1, 1], [], []>} : vector<64x128xf32>, vector<128x128xf32>, vector<64x128xf32> -> vector<64x128xf32>
    %cst_21 = arith.constant 2.000000e+00 : f32
    %28 = vector.broadcast %cst_21 : f32 to vector<64x128xf32>
    %29 = arith.mulf %28, %27 : vector<64x128xf32>
    %30 = arith.subf %29, %21 : vector<64x128xf32>
    %31 = tpu.concatenate %20, %21, %25, %26, %30 in 0 : vector<64x128xf32>, vector<64x128xf32>, vector<64x128xf32>, vector<64x128xf32>, vector<64x128xf32> -> vector<320x128xf32>
    %c0_22 = arith.constant 0 : index
    %c0_23 = arith.constant 0 : index
    %32 = vector.load %arg6[%c0_22, %c0_23] : memref<64x320xf32, #tpu.memory_space<vmem>>, vector<64x320xf32>
    %cst_24 = arith.constant dense<0.000000e+00> : vector<64x128xf32>
    %33 = tpu.matmul %32, %31, %cst_24 {dimension_numbers = #tpu.dot_dimension_numbers<[1], [0], [0], [1], [0, 0, 1, 1], [], []>} : vector<64x320xf32>, vector<320x128xf32>, vector<64x128xf32> -> vector<64x128xf32>
    %c0_25 = arith.constant 0 : index
    %c0_26 = arith.constant 0 : index
    %34 = vector.load %arg7[%c0_25, %c0_26] : memref<64x1xf32, #tpu.memory_space<vmem>>, vector<64x1xf32>
    %35 = vector.broadcast %34 : vector<64x1xf32> to vector<64x128xf32>
    %36 = arith.addf %33, %35 : vector<64x128xf32>
    %cst_27 = arith.constant 0.000000e+00 : f32
    %37 = vector.broadcast %cst_27 : f32 to vector<64x128xf32>
    %38 = arith.maximumf %36, %37 : vector<64x128xf32>
    %39 = arith.addf %38, %20 : vector<64x128xf32>
    %cst_28 = arith.constant dense<0.000000e+00> : vector<64x128xf32>
    %40 = tpu.matmul %39, %0, %cst_28 {dimension_numbers = #tpu.dot_dimension_numbers<[1], [0], [0], [1], [0, 0, 1, 1], [], []>} : vector<64x128xf32>, vector<128x128xf32>, vector<64x128xf32> -> vector<64x128xf32>
    %cst_29 = arith.constant dense<0.000000e+00> : vector<64x128xf32>
    %41 = tpu.matmul %40, %0, %cst_29 {dimension_numbers = #tpu.dot_dimension_numbers<[1], [0], [0], [1], [0, 0, 1, 1], [], []>} : vector<64x128xf32>, vector<128x128xf32>, vector<64x128xf32> -> vector<64x128xf32>
    %cst_30 = arith.constant 2.000000e+00 : f32
    %42 = vector.broadcast %cst_30 : f32 to vector<64x128xf32>
    %43 = arith.mulf %42, %41 : vector<64x128xf32>
    %44 = arith.subf %43, %39 : vector<64x128xf32>
    %cst_31 = arith.constant dense<0.000000e+00> : vector<64x128xf32>
    %45 = tpu.matmul %40, %1, %cst_31 {dimension_numbers = #tpu.dot_dimension_numbers<[1], [0], [0], [1], [0, 0, 1, 1], [], []>} : vector<64x128xf32>, vector<128x128xf32>, vector<64x128xf32> -> vector<64x128xf32>
    %cst_32 = arith.constant dense<0.000000e+00> : vector<64x128xf32>
    %46 = tpu.matmul %45, %1, %cst_32 {dimension_numbers = #tpu.dot_dimension_numbers<[1], [0], [0], [1], [0, 0, 1, 1], [], []>} : vector<64x128xf32>, vector<128x128xf32>, vector<64x128xf32> -> vector<64x128xf32>
    %cst_33 = arith.constant 2.000000e+00 : f32
    %47 = vector.broadcast %cst_33 : f32 to vector<64x128xf32>
    %48 = arith.mulf %47, %46 : vector<64x128xf32>
    %49 = arith.subf %48, %40 : vector<64x128xf32>
    %50 = tpu.concatenate %39, %40, %44, %45, %49 in 0 : vector<64x128xf32>, vector<64x128xf32>, vector<64x128xf32>, vector<64x128xf32>, vector<64x128xf32> -> vector<320x128xf32>
    %c0_34 = arith.constant 0 : index
    %c0_35 = arith.constant 0 : index
    %51 = vector.load %arg8[%c0_34, %c0_35] : memref<16x320xf32, #tpu.memory_space<vmem>>, vector<16x320xf32>
    %cst_36 = arith.constant dense<0.000000e+00> : vector<16x128xf32>
    %52 = tpu.matmul %51, %50, %cst_36 {dimension_numbers = #tpu.dot_dimension_numbers<[1], [0], [0], [1], [0, 0, 1, 1], [], []>} : vector<16x320xf32>, vector<320x128xf32>, vector<16x128xf32> -> vector<16x128xf32>
    %c0_37 = arith.constant 0 : index
    %c0_38 = arith.constant 0 : index
    %53 = vector.load %arg9[%c0_37, %c0_38] : memref<16x1xf32, #tpu.memory_space<vmem>>, vector<16x1xf32>
    %54 = vector.broadcast %53 : vector<16x1xf32> to vector<16x128xf32>
    %55 = arith.addf %52, %54 : vector<16x128xf32>
    %cst_39 = arith.constant 0.000000e+00 : f32
    %56 = vector.broadcast %cst_39 : f32 to vector<16x128xf32>
    %57 = arith.maximumf %55, %56 : vector<16x128xf32>
    %c0_40 = arith.constant 0 : index
    %c0_41 = arith.constant 0 : index
    %58 = vector.load %arg10[%c0_40, %c0_41] : memref<16x128xf32, #tpu.memory_space<vmem>>, vector<16x128xf32>
    tpu.vector_store %arg10[%c0_40, %c0_41], %57 {strides = array<i32>} : memref<16x128xf32, #tpu.memory_space<vmem>>, vector<16x128xf32>,
    return
  }
  func.func @transform_0(%arg0: i32) -> (i32, i32) {
    %c0_i32 = arith.constant 0 : i32
    %c0_i32_0 = arith.constant 0 : i32
    %c0_i32_1 = arith.constant 0 : i32
    return %c0_i32, %c0_i32_0 : i32, i32
  }
  func.func @transform_1(%arg0: i32) -> (i32, i32) {
    %c0_i32 = arith.constant 0 : i32
    %c0_i32_0 = arith.constant 0 : i32
    %c0_i32_1 = arith.constant 0 : i32
    return %c0_i32, %c0_i32_0 : i32, i32
  }
  func.func @transform_2(%arg0: i32) -> (i32, i32) {
    %c0_i32 = arith.constant 0 : i32
    %c0_i32_0 = arith.constant 0 : i32
    %c0_i32_1 = arith.constant 0 : i32
    return %c0_i32, %c0_i32_0 : i32, i32
  }
  func.func @transform_3(%arg0: i32) -> (i32, i32) {
    %c0_i32 = arith.constant 0 : i32
    %c0_i32_0 = arith.constant 0 : i32
    %c0_i32_1 = arith.constant 0 : i32
    return %c0_i32, %c0_i32_0 : i32, i32
  }
  func.func @transform_4(%arg0: i32) -> (i32, i32) {
    %c0_i32 = arith.constant 0 : i32
    %c0_i32_0 = arith.constant 0 : i32
    %c0_i32_1 = arith.constant 0 : i32
    return %c0_i32, %c0_i32_0 : i32, i32
  }
  func.func @transform_5(%arg0: i32) -> (i32, i32) {
    %c0_i32 = arith.constant 0 : i32
    %c0_i32_0 = arith.constant 0 : i32
    %c0_i32_1 = arith.constant 0 : i32
    return %c0_i32, %c0_i32_0 : i32, i32
  }
  func.func @transform_6(%arg0: i32) -> (i32, i32) {
    %c0_i32 = arith.constant 0 : i32
    %c0_i32_0 = arith.constant 0 : i32
    %c0_i32_1 = arith.constant 0 : i32
    return %c0_i32, %c0_i32_0 : i32, i32
  }
  func.func @transform_7(%arg0: i32) -> (i32, i32) {
    %c0_i32 = arith.constant 0 : i32
    %c0_i32_0 = arith.constant 0 : i32
    %c0_i32_1 = arith.constant 0 : i32
    return %c0_i32, %c0_i32_0 : i32, i32
  }
  func.func @transform_8(%arg0: i32) -> (i32, i32) {
    %c0_i32 = arith.constant 0 : i32
    %c0_i32_0 = arith.constant 0 : i32
    %c0_i32_1 = arith.constant 0 : i32
    return %c0_i32, %c0_i32_0 : i32, i32
  }
  func.func @transform_9(%arg0: i32) -> (i32, i32) {
    %c0_i32 = arith.constant 0 : i32
    %c0_i32_0 = arith.constant 0 : i32
    %c0_i32_1 = arith.constant 0 : i32
    return %c0_i32, %c0_i32_0 : i32, i32
  }
}

</mosaic_0001>

<llo_original>
// kernel: tile.18
$region0: #{tile.18}
  #allocation0 [shape = 's32[1]{0}', space=sflag, size = 0x4, scoped, tag = 'scoped memory for tile.18']
  %s0 = inlined_call_operand.vmem [shape: f32[32], index: 0, kind: input, shape index: {}]
  %s1 = inlined_call_operand.vmem [shape: f32[2,32], index: 1, kind: output, shape index: {}]
  // Predicated region
  $region2: #{tile.18} parent=0 // pred_check
    _
  $region3: #{tile.18} parent=0 // pred_check_branch
    %3 = sbr.rel (0) target = $region5
  $region4: #{tile.18} parent=0 // pred_region
    _
  $region5: #{tile.18} parent=0 // pred_fallthru
    _
  %v4 = vld [vmem:[%s0] ss:$0 sm:$0xff]
  %5 = vst [vmem:[%s1] sm:$0x3] %v4

// kernel: tile.0
$region0: #{tile.0}
  %s0 = inlined_call_operand.vmem [shape: f32[2,32], index: 0, kind: input, shape index: {}]
  %s1 = inlined_call_operand.vmem [shape: f32[64,1], index: 1, kind: output, shape index: {}]
  $region1: #{tile.0} parent=0
    #allocation0 [shape = 'u8[4096]{0}', space=vmem, size = 0x1000, scoped, tag = 'scoped mem for input reshape']
    %s3 = sshll.u32 1, 2
    %s4 = ssub.s32 %s3, 1
    %v5 = vld [vmem:[%s0] sm:%s4]
    %6 = vst [vmem:[#allocation0] sm:%s4] %v5
    %v7 = vld [vmem:[#allocation0] sm:$0x3]
    %vm8 = vcmask 7168
    %9 = vst.msk [vmem:[%s1] sm:$0x1] %vm8, %v7
    %s10 = scalar_lea.vmem %s1, 31
    %11 = vst.msk [vmem:[%s10] sm:$0x2] %vm8, %v7
    %v12 = vld [vmem:[#allocation0] sm:$0x3]
    %13 = vrot.lane.b32.xlu0 %v12, 127
    %v14 = vpop.permute.xlu0 %13
    %vm15 = vcmask 7168
    %s16 = scalar_lea.vmem %s1, 1
    %17 = vst.msk [vmem:[%s16] sm:$0x1] %vm15, %v14
    %s18 = scalar_lea.vmem %s1, 32
    %19 = vst.msk [vmem:[%s18] sm:$0x2] %vm15, %v14
    %v20 = vld [vmem:[#allocation0] sm:$0x3]
    %21 = vrot.lane.b32.xlu0 %v20, 126
    %v22 = vpop.permute.xlu0 %21
    %vm23 = vcmask 7168
    %s24 = scalar_lea.vmem %s1, 2
    %25 = vst.msk [vmem:[%s24] sm:$0x1] %vm23, %v22
    %s26 = scalar_lea.vmem %s1, 33
    %27 = vst.msk [vmem:[%s26] sm:$0x2] %vm23, %v22
    %v28 = vld [vmem:[#allocation0] sm:$0x3]
    %29 = vrot.lane.b32.xlu0 %v28, 125
    %v30 = vpop.permute.xlu0 %29
    %vm31 = vcmask 7168
    %s32 = scalar_lea.vmem %s1, 3
    %33 = vst.msk [vmem:[%s32] sm:$0x1] %vm31, %v30
    %s34 = scalar_lea.vmem %s1, 34
    %35 = vst.msk [vmem:[%s34] sm:$0x2] %vm31, %v30
    %v36 = vld [vmem:[#allocation0] sm:$0x3]
    %37 = vrot.lane.b32.xlu0 %v36, 124
    %v38 = vpop.permute.xlu0 %37
    %vm39 = vcmask 7168
    %s40 = scalar_lea.vmem %s1, 4
    %41 = vst.msk [vmem:[%s40] sm:$0x1] %vm39, %v38
    %s42 = scalar_lea.vmem %s1, 35
    %43 = vst.msk [vmem:[%s42] sm:$0x2] %vm39, %v38
    %v44 = vld [vmem:[#allocation0] sm:$0x3]
    %45 = vrot.lane.b32.xlu0 %v44, 123
    %v46 = vpop.permute.xlu0 %45
    %vm47 = vcmask 7168
    %s48 = scalar_lea.vmem %s1, 5
    %49 = vst.msk [vmem:[%s48] sm:$0x1] %vm47, %v46
    %s50 = scalar_lea.vmem %s1, 36
    %51 = vst.msk [vmem:[%s50] sm:$0x2] %vm47, %v46
    %v52 = vld [vmem:[#allocation0] sm:$0x3]
    %53 = vrot.lane.b32.xlu0 %v52, 122
    %v54 = vpop.permute.xlu0 %53
    %vm55 = vcmask 7168
    %s56 = scalar_lea.vmem %s1, 6
    %57 = vst.msk [vmem:[%s56] sm:$0x1] %vm55, %v54
    %s58 = scalar_lea.vmem %s1, 37
    %59 = vst.msk [vmem:[%s58] sm:$0x2] %vm55, %v54
    %v60 = vld [vmem:[#allocation0] sm:$0x3]
    %61 = vrot.lane.b32.xlu0 %v60, 121
    %v62 = vpop.permute.xlu0 %61
    %vm63 = vcmask 7168
    %s64 = scalar_lea.vmem %s1, 7
    %65 = vst.msk [vmem:[%s64] sm:$0x1] %vm63, %v62
    %s66 = scalar_lea.vmem %s1, 38
    %67 = vst.msk [vmem:[%s66] sm:$0x2] %vm63, %v62
    %v68 = vld [vmem:[#allocation0] sm:$0x3]
    %69 = vrot.lane.b32.xlu0 %v68, 120
    %v70 = vpop.permute.xlu0 %69
    %vm71 = vcmask 7168
    %s72 = scalar_lea.vmem %s1, 8
    %73 = vst.msk [vmem:[%s72] sm:$0x1] %vm71, %v70
    %s74 = scalar_lea.vmem %s1, 39
    %75 = vst.msk [vmem:[%s74] sm:$0x2] %vm71, %v70
    %v76 = vld [vmem:[#allocation0] sm:$0x3]
    %77 = vrot.lane.b32.xlu0 %v76, 119
    %v78 = vpop.permute.xlu0 %77
    %vm79 = vcmask 7168
    %s80 = scalar_lea.vmem %s1, 9
    %81 = vst.msk [vmem:[%s80] sm:$0x1] %vm79, %v78
    %s82 = scalar_lea.vmem %s1, 40
    %83 = vst.msk [vmem:[%s82] sm:$0x2] %vm79, %v78
    %v84 = vld [vmem:[#allocation0] sm:$0x3]
    %85 = vrot.lane.b32.xlu0 %v84, 118
    %v86 = vpop.permute.xlu0 %85
    %vm87 = vcmask 7168
    %s88 = scalar_lea.vmem %s1, 10
    %89 = vst.msk [vmem:[%s88] sm:$0x1] %vm87, %v86
    %s90 = scalar_lea.vmem %s1, 41
    %91 = vst.msk [vmem:[%s90] sm:$0x2] %vm87, %v86
    %v92 = vld [vmem:[#allocation0] sm:$0x3]
    %93 = vrot.lane.b32.xlu0 %v92, 117
    %v94 = vpop.permute.xlu0 %93
    %vm95 = vcmask 7168
    %s96 = scalar_lea.vmem %s1, 11
    %97 = vst.msk [vmem:[%s96] sm:$0x1] %vm95, %v94
    %s98 = scalar_lea.vmem %s1, 42
    %99 = vst.msk [vmem:[%s98] sm:$0x2] %vm95, %v94
    %v100 = vld [vmem:[#allocation0] sm:$0x3]
    %101 = vrot.lane.b32.xlu0 %v100, 116
    %v102 = vpop.permute.xlu0 %101
    %vm103 = vcmask 7168
    %s104 = scalar_lea.vmem %s1, 12
    %105 = vst.msk [vmem:[%s104] sm:$0x1] %vm103, %v102
    %s106 = scalar_lea.vmem %s1, 43
    %107 = vst.msk [vmem:[%s106] sm:$0x2] %vm103, %v102
    %v108 = vld [vmem:[#allocation0] sm:$0x3]
    %109 = vrot.lane.b32.xlu0 %v108, 115
    %v110 = vpop.permute.xlu0 %109
    %vm111 = vcmask 7168
    %s112 = scalar_lea.vmem %s1, 13
    %113 = vst.msk [vmem:[%s112] sm:$0x1] %vm111, %v110
    %s114 = scalar_lea.vmem %s1, 44
    %115 = vst.msk [vmem:[%s114] sm:$0x2] %vm111, %v110
    %v116 = vld [vmem:[#allocation0] sm:$0x3]
    %117 = vrot.lane.b32.xlu0 %v116, 114
    %v118 = vpop.permute.xlu0 %117
    %vm119 = vcmask 7168
    %s120 = scalar_lea.vmem %s1, 14
    %121 = vst.msk [vmem:[%s120] sm:$0x1] %vm119, %v118
    %s122 = scalar_lea.vmem %s1, 45
    %123 = vst.msk [vmem:[%s122] sm:$0x2] %vm119, %v118
    %v124 = vld [vmem:[#allocation0] sm:$0x3]
    %125 = vrot.lane.b32.xlu0 %v124, 113
    %v126 = vpop.permute.xlu0 %125
    %vm127 = vcmask 7168
    %s128 = scalar_lea.vmem %s1, 15
    %129 = vst.msk [vmem:[%s128] sm:$0x1] %vm127, %v126
    %s130 = scalar_lea.vmem %s1, 46
    %131 = vst.msk [vmem:[%s130] sm:$0x2] %vm127, %v126
    %v132 = vld [vmem:[#allocation0] sm:$0x3]
    %133 = vrot.lane.b32.xlu0 %v132, 112
    %v134 = vpop.permute.xlu0 %133
    %vm135 = vcmask 7168
    %s136 = scalar_lea.vmem %s1, 16
    %137 = vst.msk [vmem:[%s136] sm:$0x1] %vm135, %v134
    %s138 = scalar_lea.vmem %s1, 47
    %139 = vst.msk [vmem:[%s138] sm:$0x2] %vm135, %v134
    %v140 = vld [vmem:[#allocation0] sm:$0x3]
    %141 = vrot.lane.b32.xlu0 %v140, 111
    %v142 = vpop.permute.xlu0 %141
    %vm143 = vcmask 7168
    %s144 = scalar_lea.vmem %s1, 17
    %145 = vst.msk [vmem:[%s144] sm:$0x1] %vm143, %v142
    %s146 = scalar_lea.vmem %s1, 48
    %147 = vst.msk [vmem:[%s146] sm:$0x2] %vm143, %v142
    %v148 = vld [vmem:[#allocation0] sm:$0x3]
    %149 = vrot.lane.b32.xlu0 %v148, 110
    %v150 = vpop.permute.xlu0 %149
    %vm151 = vcmask 7168
    %s152 = scalar_lea.vmem %s1, 18
    %153 = vst.msk [vmem:[%s152] sm:$0x1] %vm151, %v150
    %s154 = scalar_lea.vmem %s1, 49
    %155 = vst.msk [vmem:[%s154] sm:$0x2] %vm151, %v150
    %v156 = vld [vmem:[#allocation0] sm:$0x3]
    %157 = vrot.lane.b32.xlu0 %v156, 109
    %v158 = vpop.permute.xlu0 %157
    %vm159 = vcmask 7168
    %s160 = scalar_lea.vmem %s1, 19
    %161 = vst.msk [vmem:[%s160] sm:$0x1] %vm159, %v158
    %s162 = scalar_lea.vmem %s1, 50
    %163 = vst.msk [vmem:[%s162] sm:$0x2] %vm159, %v158
    %v164 = vld [vmem:[#allocation0] sm:$0x3]
    %165 = vrot.lane.b32.xlu0 %v164, 108
    %v166 = vpop.permute.xlu0 %165
    %vm167 = vcmask 7168
    %s168 = scalar_lea.vmem %s1, 20
    %169 = vst.msk [vmem:[%s168] sm:$0x1] %vm167, %v166
    %s170 = scalar_lea.vmem %s1, 51
    %171 = vst.msk [vmem:[%s170] sm:$0x2] %vm167, %v166
    %v172 = vld [vmem:[#allocation0] sm:$0x3]
    %173 = vrot.lane.b32.xlu0 %v172, 107
    %v174 = vpop.permute.xlu0 %173
    %vm175 = vcmask 7168
    %s176 = scalar_lea.vmem %s1, 21
    %177 = vst.msk [vmem:[%s176] sm:$0x1] %vm175, %v174
    %s178 = scalar_lea.vmem %s1, 52
    %179 = vst.msk [vmem:[%s178] sm:$0x2] %vm175, %v174
    %v180 = vld [vmem:[#allocation0] sm:$0x3]
    %181 = vrot.lane.b32.xlu0 %v180, 106
    %v182 = vpop.permute.xlu0 %181
    %vm183 = vcmask 7168
    %s184 = scalar_lea.vmem %s1, 22
    %185 = vst.msk [vmem:[%s184] sm:$0x1] %vm183, %v182
    %s186 = scalar_lea.vmem %s1, 53
    %187 = vst.msk [vmem:[%s186] sm:$0x2] %vm183, %v182
    %v188 = vld [vmem:[#allocation0] sm:$0x3]
    %189 = vrot.lane.b32.xlu0 %v188, 105
    %v190 = vpop.permute.xlu0 %189
    %vm191 = vcmask 7168
    %s192 = scalar_lea.vmem %s1, 23
    %193 = vst.msk [vmem:[%s192] sm:$0x1] %vm191, %v190
    %s194 = scalar_lea.vmem %s1, 54
    %195 = vst.msk [vmem:[%s194] sm:$0x2] %vm191, %v190
    %v196 = vld [vmem:[#allocation0] sm:$0x3]
    %197 = vrot.lane.b32.xlu0 %v196, 104
    %v198 = vpop.permute.xlu0 %197
    %vm199 = vcmask 7168
    %s200 = scalar_lea.vmem %s1, 24
    %201 = vst.msk [vmem:[%s200] sm:$0x1] %vm199, %v198
    %s202 = scalar_lea.vmem %s1, 55
    %203 = vst.msk [vmem:[%s202] sm:$0x2] %vm199, %v198
    %v204 = vld [vmem:[#allocation0] sm:$0x3]
    %205 = vrot.lane.b32.xlu0 %v204, 103
    %v206 = vpop.permute.xlu0 %205
    %vm207 = vcmask 7168
    %s208 = scalar_lea.vmem %s1, 25
    %209 = vst.msk [vmem:[%s208] sm:$0x1] %vm207, %v206
    %s210 = scalar_lea.vmem %s1, 56
    %211 = vst.msk [vmem:[%s210] sm:$0x2] %vm207, %v206
    %v212 = vld [vmem:[#allocation0] sm:$0x3]
    %213 = vrot.lane.b32.xlu0 %v212, 102
    %v214 = vpop.permute.xlu0 %213
    %vm215 = vcmask 7168
    %s216 = scalar_lea.vmem %s1, 26
    %217 = vst.msk [vmem:[%s216] sm:$0x1] %vm215, %v214
    %s218 = scalar_lea.vmem %s1, 57
    %219 = vst.msk [vmem:[%s218] sm:$0x2] %vm215, %v214
    %v220 = vld [vmem:[#allocation0] sm:$0x3]
    %221 = vrot.lane.b32.xlu0 %v220, 101
    %v222 = vpop.permute.xlu0 %221
    %vm223 = vcmask 7168
    %s224 = scalar_lea.vmem %s1, 27
    %225 = vst.msk [vmem:[%s224] sm:$0x1] %vm223, %v222
    %s226 = scalar_lea.vmem %s1, 58
    %227 = vst.msk [vmem:[%s226] sm:$0x2] %vm223, %v222
    %v228 = vld [vmem:[#allocation0] sm:$0x3]
    %229 = vrot.lane.b32.xlu0 %v228, 100
    %v230 = vpop.permute.xlu0 %229
    %vm231 = vcmask 7168
    %s232 = scalar_lea.vmem %s1, 28
    %233 = vst.msk [vmem:[%s232] sm:$0x1] %vm231, %v230
    %s234 = scalar_lea.vmem %s1, 59
    %235 = vst.msk [vmem:[%s234] sm:$0x2] %vm231, %v230
    %v236 = vld [vmem:[#allocation0] sm:$0x3]
    %237 = vrot.lane.b32.xlu0 %v236, 99
    %v238 = vpop.permute.xlu0 %237
    %vm239 = vcmask 7168
    %s240 = scalar_lea.vmem %s1, 29
    %241 = vst.msk [vmem:[%s240] sm:$0x1] %vm239, %v238
    %s242 = scalar_lea.vmem %s1, 60
    %243 = vst.msk [vmem:[%s242] sm:$0x2] %vm239, %v238
    %v244 = vld [vmem:[#allocation0] sm:$0x3]
    %245 = vrot.lane.b32.xlu0 %v244, 98
    %v246 = vpop.permute.xlu0 %245
    %vm247 = vcmask 7168
    %s248 = scalar_lea.vmem %s1, 30
    %249 = vst.msk [vmem:[%s248] sm:$0x1] %vm247, %v246
    %s250 = scalar_lea.vmem %s1, 61
    %251 = vst.msk [vmem:[%s250] sm:$0x2] %vm247, %v246
    %v252 = vld [vmem:[#allocation0] sm:$0x3]
    %253 = vrot.lane.b32.xlu0 %v252, 97
    %v254 = vpop.permute.xlu0 %253
    %vm255 = vcmask 7168
    %s256 = scalar_lea.vmem %s1, 31
    %257 = vst.msk [vmem:[%s256] sm:$0x1] %vm255, %v254
    %s258 = scalar_lea.vmem %s1, 62
    %259 = vst.msk [vmem:[%s258] sm:$0x2] %vm255, %v254

// kernel: tile.28
$region0: #{tile.28}
  #allocation0 [shape = 's32[1]{0}', space=sflag, size = 0x4, scoped, tag = 'scoped memory for tile.28']
  %s0 = inlined_call_operand.vmem [shape: f32[8], index: 0, kind: input, shape index: {}]
  %s1 = inlined_call_operand.vmem [shape: f32[2,8], index: 1, kind: output, shape index: {}]
  // Predicated region
  $region2: #{tile.28} parent=0 // pred_check
    _
  $region3: #{tile.28} parent=0 // pred_check_branch
    %3 = sbr.rel (0) target = $region5
  $region4: #{tile.28} parent=0 // pred_region
    _
  $region5: #{tile.28} parent=0 // pred_fallthru
    _
  %v4 = vld [vmem:[%s0] ss:$0 sm:$0xff]
  %5 = vst [vmem:[%s1] sm:$0x3] %v4

// kernel: tile.2
$region0: #{tile.2}
  %s0 = inlined_call_operand.vmem [shape: f32[2,8], index: 0, kind: input, shape index: {}]
  %s1 = inlined_call_operand.vmem [shape: f32[16,1], index: 1, kind: output, shape index: {}]
  $region1: #{tile.2} parent=0
    #allocation0 [shape = 'u8[4096]{0}', space=vmem, size = 0x1000, scoped, tag = 'scoped mem for input reshape']
    %s3 = sshll.u32 1, 2
    %s4 = ssub.s32 %s3, 1
    %v5 = vld [vmem:[%s0] sm:%s4]
    %6 = vst [vmem:[#allocation0] sm:%s4] %v5
    %v7 = vld [vmem:[#allocation0] sm:$0x3]
    %vm8 = vcmask 7168
    %9 = vst.msk [vmem:[%s1] ss:$8 sm:$0x3] %vm8, %v7
    %v10 = vld [vmem:[#allocation0] sm:$0x3]
    %11 = vrot.lane.b32.xlu0 %v10, 127
    %v12 = vpop.permute.xlu0 %11
    %vm13 = vcmask 7168
    %s14 = scalar_lea.vmem %s1, 1
    %15 = vst.msk [vmem:[%s14] ss:$8 sm:$0x3] %vm13, %v12
    %v16 = vld [vmem:[#allocation0] sm:$0x3]
    %17 = vrot.lane.b32.xlu0 %v16, 126
    %v18 = vpop.permute.xlu0 %17
    %vm19 = vcmask 7168
    %s20 = scalar_lea.vmem %s1, 2
    %21 = vst.msk [vmem:[%s20] ss:$8 sm:$0x3] %vm19, %v18
    %v22 = vld [vmem:[#allocation0] sm:$0x3]
    %23 = vrot.lane.b32.xlu0 %v22, 125
    %v24 = vpop.permute.xlu0 %23
    %vm25 = vcmask 7168
    %s26 = scalar_lea.vmem %s1, 3
    %27 = vst.msk [vmem:[%s26] ss:$8 sm:$0x3] %vm25, %v24
    %v28 = vld [vmem:[#allocation0] sm:$0x3]
    %29 = vrot.lane.b32.xlu0 %v28, 124
    %v30 = vpop.permute.xlu0 %29
    %vm31 = vcmask 7168
    %s32 = scalar_lea.vmem %s1, 4
    %33 = vst.msk [vmem:[%s32] ss:$8 sm:$0x3] %vm31, %v30
    %v34 = vld [vmem:[#allocation0] sm:$0x3]
    %35 = vrot.lane.b32.xlu0 %v34, 123
    %v36 = vpop.permute.xlu0 %35
    %vm37 = vcmask 7168
    %s38 = scalar_lea.vmem %s1, 5
    %39 = vst.msk [vmem:[%s38] ss:$8 sm:$0x3] %vm37, %v36
    %v40 = vld [vmem:[#allocation0] sm:$0x3]
    %41 = vrot.lane.b32.xlu0 %v40, 122
    %v42 = vpop.permute.xlu0 %41
    %vm43 = vcmask 7168
    %s44 = scalar_lea.vmem %s1, 6
    %45 = vst.msk [vmem:[%s44] ss:$8 sm:$0x3] %vm43, %v42
    %v46 = vld [vmem:[#allocation0] sm:$0x3]
    %47 = vrot.lane.b32.xlu0 %v46, 121
    %v48 = vpop.permute.xlu0 %47
    %vm49 = vcmask 7168
    %s50 = scalar_lea.vmem %s1, 7
    %51 = vst.msk [vmem:[%s50] ss:$8 sm:$0x3] %vm49, %v48

// kernel: ignnk_forward.1
$region0: #{ignnk_forward.1}
  #allocation0 [shape = 'u32[]', space=smem, size = 0x4, offset = 0x4, fixed_abs, tag = 'smem constant byte address 0x4 - core index']
  #allocation1 [shape = 'u32[144,128]{1,0:T(1,128)}', space=vmem, size = 0x12000, scoped, tag = 'internal scratch']
  %s0 = inlined_call_operand.vmem [shape: f32[16,128], index: 0, kind: input, shape index: {}]
  %s1 = inlined_call_operand.vmem [shape: f32[128,128], index: 1, kind: input, shape index: {}]
  %s2 = inlined_call_operand.vmem [shape: f32[128,128], index: 2, kind: input, shape index: {}]
  %s3 = inlined_call_operand.vmem [shape: f32[64,80], index: 3, kind: input, shape index: {}]
  %s4 = inlined_call_operand.vmem [shape: f32[64,1], index: 4, kind: input, shape index: {}]
  %s5 = inlined_call_operand.vmem [shape: f32[64,320], index: 5, kind: input, shape index: {}]
  %s6 = inlined_call_operand.vmem [shape: f32[64,1], index: 6, kind: input, shape index: {}]
  %s7 = inlined_call_operand.vmem [shape: f32[16,320], index: 7, kind: input, shape index: {}]
  %s8 = inlined_call_operand.vmem [shape: f32[16,1], index: 8, kind: input, shape index: {}]
  %s9 = inlined_call_operand.hbm [shape: f32[16,128], index: 9, kind: output, shape index: {}]
  %s10 = sld [smem:[#allocation0]]
  $region46: #{ignnk_forward.1} parent=0
    _
  %s12 = ssub.s32 1, %s10
  %s13 = scalar_select 0, %s12, %s10
  $region1: #{ignnk_forward.1} parent=0
    #allocation2 [shape = 'u8[8192]{0}', space=vmem, size = 0x2000, scoped, tag = 'output window, operand 0, single buffered']
    #allocation3 [shape = 's32[1]{0}', space=sflag, size = 0x4, scoped, tag = 'scoped memory for ignnk_forward.1']
    %14 = vsyncpa [#allocation3], 0
    // Predicated region
    $region2: #{ignnk_forward.1} parent=1 // pred_check
      _
    $region3: #{ignnk_forward.1} parent=1 // pred_check_branch
      %16 = sbr.rel (0) target = $region5
    $region4: #{ignnk_forward.1} parent=1 // pred_region
      _
    $region5: #{ignnk_forward.1} parent=1 // pred_fallthru
      _
    // Predicated region
    $region6: #{ignnk_forward.1} parent=1 // pred_check
      _
    $region7: #{ignnk_forward.1} parent=1 // pred_check_branch
      %18 = sbr.rel (0) target = $region9
    $region8: #{ignnk_forward.1} parent=1 // pred_region
      _
    $region9: #{ignnk_forward.1} parent=1 // pred_fallthru
      _
    // Predicated region
    $region10: #{ignnk_forward.1} parent=1 // pred_check
      _
    $region11: #{ignnk_forward.1} parent=1 // pred_check_branch
      %20 = sbr.rel (0) target = $region13
    $region12: #{ignnk_forward.1} parent=1 // pred_region
      _
    $region13: #{ignnk_forward.1} parent=1 // pred_fallthru
      _
    // Predicated region
    $region14: #{ignnk_forward.1} parent=1 // pred_check
      _
    $region15: #{ignnk_forward.1} parent=1 // pred_check_branch
      %22 = sbr.rel (0) target = $region17
    $region16: #{ignnk_forward.1} parent=1 // pred_region
      _
    $region17: #{ignnk_forward.1} parent=1 // pred_fallthru
      _
    // Predicated region
    $region18: #{ignnk_forward.1} parent=1 // pred_check
      _
    $region19: #{ignnk_forward.1} parent=1 // pred_check_branch
      %24 = sbr.rel (0) target = $region21
    $region20: #{ignnk_forward.1} parent=1 // pred_region
      _
    $region21: #{ignnk_forward.1} parent=1 // pred_fallthru
      _
    // Predicated region
    $region22: #{ignnk_forward.1} parent=1 // pred_check
      _
    $region23: #{ignnk_forward.1} parent=1 // pred_check_branch
      %26 = sbr.rel (0) target = $region25
    $region24: #{ignnk_forward.1} parent=1 // pred_region
      _
    $region25: #{ignnk_forward.1} parent=1 // pred_fallthru
      _
    // Predicated region
    $region26: #{ignnk_forward.1} parent=1 // pred_check
      _
    $region27: #{ignnk_forward.1} parent=1 // pred_check_branch
      %28 = sbr.rel (0) target = $region29
    $region28: #{ignnk_forward.1} parent=1 // pred_region
      _
    $region29: #{ignnk_forward.1} parent=1 // pred_fallthru
      _
    // Predicated region
    $region30: #{ignnk_forward.1} parent=1 // pred_check
      _
    $region31: #{ignnk_forward.1} parent=1 // pred_check_branch
      %30 = sbr.rel (0) target = $region33
    $region32: #{ignnk_forward.1} parent=1 // pred_region
      _
    $region33: #{ignnk_forward.1} parent=1 // pred_fallthru
      _
    // Predicated region
    $region34: #{ignnk_forward.1} parent=1 // pred_check
      _
    $region35: #{ignnk_forward.1} parent=1 // pred_check_branch
      %32 = sbr.rel (0) target = $region37
    $region36: #{ignnk_forward.1} parent=1 // pred_region
      _
    $region37: #{ignnk_forward.1} parent=1 // pred_fallthru
      _
    %v33 = vld [vmem:[%s1] sm:$0xff]
    %v34 = vld [vmem:[%s1 + $0x8] sm:$0xff]
    %v35 = vld [vmem:[%s1 + $0x10] sm:$0xff]
    %v36 = vld [vmem:[%s1 + $0x18] sm:$0xff]
    %v37 = vld [vmem:[%s1 + $0x20] sm:$0xff]
    %v38 = vld [vmem:[%s1 + $0x28] sm:$0xff]
    %v39 = vld [vmem:[%s1 + $0x30] sm:$0xff]
    %v40 = vld [vmem:[%s1 + $0x38] sm:$0xff]
    %v41 = vld [vmem:[%s1 + $0x40] sm:$0xff]
    %v42 = vld [vmem:[%s1 + $0x48] sm:$0xff]
    %v43 = vld [vmem:[%s1 + $0x50] sm:$0xff]
    %v44 = vld [vmem:[%s1 + $0x58] sm:$0xff]
    %v45 = vld [vmem:[%s1 + $0x60] sm:$0xff]
    %v46 = vld [vmem:[%s1 + $0x68] sm:$0xff]
    %v47 = vld [vmem:[%s1 + $0x70] sm:$0xff]
    %v48 = vld [vmem:[%s1 + $0x78] sm:$0xff]
    %v49 = vld [vmem:[%s2] sm:$0xff]
    %v50 = vld [vmem:[%s2 + $0x8] sm:$0xff]
    %v51 = vld [vmem:[%s2 + $0x10] sm:$0xff]
    %v52 = vld [vmem:[%s2 + $0x18] sm:$0xff]
    %v53 = vld [vmem:[%s2 + $0x20] sm:$0xff]
    %v54 = vld [vmem:[%s2 + $0x28] sm:$0xff]
    %v55 = vld [vmem:[%s2 + $0x30] sm:$0xff]
    %v56 = vld [vmem:[%s2 + $0x38] sm:$0xff]
    %v57 = vld [vmem:[%s2 + $0x40] sm:$0xff]
    %v58 = vld [vmem:[%s2 + $0x48] sm:$0xff]
    %v59 = vld [vmem:[%s2 + $0x50] sm:$0xff]
    %v60 = vld [vmem:[%s2 + $0x58] sm:$0xff]
    %v61 = vld [vmem:[%s2 + $0x60] sm:$0xff]
    %v62 = vld [vmem:[%s2 + $0x68] sm:$0xff]
    %v63 = vld [vmem:[%s2 + $0x70] sm:$0xff]
    %v64 = vld [vmem:[%s2 + $0x78] sm:$0xff]
    %v65 = vld [vmem:[%s0] sm:$0xff]
    %v66 = vld [vmem:[%s0 + $0x8] sm:$0xff]
    %67 = vmatprep.subr.mxu0 0.0
    %68 = vmatpush1.msra.mxu0 %v48
    %69 = vmatprep.subr.mxu0 0.0
    %70 = vmatpush1.msra.mxu0 %v47
    %71 = vmatprep.subr.mxu0 0.0
    %72 = vmatpush1.msra.mxu0 %v46
    %73 = vmatprep.subr.mxu0 0.0
    %74 = vmatpush1.msra.mxu0 %v45
    %75 = vmatprep.subr.mxu0 0.0
    %76 = vmatpush1.msra.mxu0 %v44
    %77 = vmatprep.subr.mxu0 0.0
    %78 = vmatpush1.msra.mxu0 %v43
    %79 = vmatprep.subr.mxu0 0.0
    %80 = vmatpush1.msra.mxu0 %v42
    %81 = vmatprep.subr.mxu0 0.0
    %82 = vmatpush1.msra.mxu0 %v41
    %83 = vmatprep.subr.mxu0 0.0
    %84 = vmatpush1.msra.mxu0 %v40
    %85 = vmatprep.subr.mxu0 0.0
    %86 = vmatpush1.msra.mxu0 %v39
    %87 = vmatprep.subr.mxu0 0.0
    %88 = vmatpush1.msra.mxu0 %v38
    %89 = vmatprep.subr.mxu0 0.0
    %90 = vmatpush1.msra.mxu0 %v37
    %91 = vmatprep.subr.mxu0 0.0
    %92 = vmatpush1.msra.mxu0 %v36
    %93 = vmatprep.subr.mxu0 0.0
    %94 = vmatpush1.msra.mxu0 %v35
    %95 = vmatprep.subr.mxu0 0.0
    %96 = vmatpush1.msra.mxu0 %v34
    %97 = vmatprep.subr.mxu0 0.0
    %98 = vmatpush1.msra.mxu0 %v33
    %99 = vmatprep.subr.mxu0 0.0
    %100 = vmatpush2.msra.mxu0 0.0
    %101 = vmatprep.subr.mxu0 0.0
    %102 = vmatpush2.msra.mxu0 0.0
    %103 = vmatprep.subr.mxu0 0.0
    %104 = vmatpush2.msra.mxu0 0.0
    %105 = vmatprep.subr.mxu0 0.0
    %106 = vmatpush2.msra.mxu0 0.0
    %107 = vmatprep.subr.mxu0 0.0
    %108 = vmatpush2.msra.mxu0 0.0
    %109 = vmatprep.subr.mxu0 0.0
    %110 = vmatpush2.msra.mxu0 0.0
    %111 = vmatprep.subr.mxu0 0.0
    %112 = vmatpush2.msra.mxu0 0.0
    %113 = vmatprep.subr.mxu0 0.0
    %114 = vmatpush2.msra.mxu0 0.0
    %115 = vmatprep.subr.mxu0 0.0
    %116 = vmatpush2.msra.mxu0 0.0
    %117 = vmatprep.subr.mxu0 0.0
    %118 = vmatpush2.msra.mxu0 0.0
    %119 = vmatprep.subr.mxu0 0.0
    %120 = vmatpush2.msra.mxu0 0.0
    %121 = vmatprep.subr.mxu0 0.0
    %122 = vmatpush2.msra.mxu0 0.0
    %123 = vmatprep.subr.mxu0 0.0
    %124 = vmatpush2.msra.mxu0 0.0
    %125 = vmatprep.subr.mxu0 0.0
    %126 = vmatpush2.msra.mxu0 0.0
    %127 = vmatprep.subr.mxu0 0.0
    %128 = vmatpush2.msra.mxu0 0.0
    %129 = vmatprep.subr.mxu0 0.0
    %130 = vmatpush2.msra.mxu0 0.0
    %131 = vmatprep.mubr.f32.mxu0 0.0
    %132 = vmatmul.mubr.f32.gmra.mxu0 %v65
    %v133 = vpop.f32.mrf.mxu0
    %v134 = vadd.f32 0.0, %v133
    %v135 = vpop.f32.mrf.mxu0
    %136 = vmatprep.mubr.f32.mxu0 0.0
    %137 = vmatmul.mubr.f32.gmra.mxu0 %v66
    %v138 = vpop.f32.mrf.mxu0
    %v139 = vadd.f32 0.0, %v138
    %v140 = vpop.f32.mrf.mxu0
    %141 = vdwg.mxu0
    %142 = vmatprep.subr.mxu0 0.0
    %143 = vmatpush1.msra.mxu0 %v48
    %144 = vmatprep.subr.mxu0 0.0
    %145 = vmatpush1.msra.mxu0 %v47
    %146 = vmatprep.subr.mxu0 0.0
    %147 = vmatpush1.msra.mxu0 %v46
    %148 = vmatprep.subr.mxu0 0.0
    %149 = vmatpush1.msra.mxu0 %v45
    %150 = vmatprep.subr.mxu0 0.0
    %151 = vmatpush1.msra.mxu0 %v44
    %152 = vmatprep.subr.mxu0 0.0
    %153 = vmatpush1.msra.mxu0 %v43
    %154 = vmatprep.subr.mxu0 0.0
    %155 = vmatpush1.msra.mxu0 %v42
    %156 = vmatprep.subr.mxu0 0.0
    %157 = vmatpush1.msra.mxu0 %v41
    %158 = vmatprep.subr.mxu0 0.0
    %159 = vmatpush1.msra.mxu0 %v40
    %160 = vmatprep.subr.mxu0 0.0
    %161 = vmatpush1.msra.mxu0 %v39
    %162 = vmatprep.subr.mxu0 0.0
    %163 = vmatpush1.msra.mxu0 %v38
    %164 = vmatprep.subr.mxu0 0.0
    %165 = vmatpush1.msra.mxu0 %v37
    %166 = vmatprep.subr.mxu0 0.0
    %167 = vmatpush1.msra.mxu0 %v36
    %168 = vmatprep.subr.mxu0 0.0
    %169 = vmatpush1.msra.mxu0 %v35
    %170 = vmatprep.subr.mxu0 0.0
    %171 = vmatpush1.msra.mxu0 %v34
    %172 = vmatprep.subr.mxu0 0.0
    %173 = vmatpush1.msra.mxu0 %v33
    %174 = vmatprep.subr.mxu0 0.0
    %175 = vmatpush2.msra.mxu0 0.0
    %176 = vmatprep.subr.mxu0 0.0
    %177 = vmatpush2.msra.mxu0 0.0
    %178 = vmatprep.subr.mxu0 0.0
    %179 = vmatpush2.msra.mxu0 0.0
    %180 = vmatprep.subr.mxu0 0.0
    %181 = vmatpush2.msra.mxu0 0.0
    %182 = vmatprep.subr.mxu0 0.0
    %183 = vmatpush2.msra.mxu0 0.0
    %184 = vmatprep.subr.mxu0 0.0
    %185 = vmatpush2.msra.mxu0 0.0
    %186 = vmatprep.subr.mxu0 0.0
    %187 = vmatpush2.msra.mxu0 0.0
    %188 = vmatprep.subr.mxu0 0.0
    %189 = vmatpush2.msra.mxu0 0.0
    %190 = vmatprep.subr.mxu0 0.0
    %191 = vmatpush2.msra.mxu0 0.0
    %192 = vmatprep.subr.mxu0 0.0
    %193 = vmatpush2.msra.mxu0 0.0
    %194 = vmatprep.subr.mxu0 0.0
    %195 = vmatpush2.msra.mxu0 0.0
    %196 = vmatprep.subr.mxu0 0.0
    %197 = vmatpush2.msra.mxu0 0.0
    %198 = vmatprep.subr.mxu0 0.0
    %199 = vmatpush2.msra.mxu0 0.0
    %200 = vmatprep.subr.mxu0 0.0
    %201 = vmatpush2.msra.mxu0 0.0
    %202 = vmatprep.subr.mxu0 0.0
    %203 = vmatpush2.msra.mxu0 0.0
    %204 = vmatprep.subr.mxu0 0.0
    %205 = vmatpush2.msra.mxu0 0.0
    %206 = vmatprep.mubr.f32.mxu0 0.0
    %207 = vmatmul.mubr.f32.gmra.mxu0 %v134
    %v208 = vpop.f32.mrf.mxu0
    %v209 = vadd.f32 0.0, %v208
    %v210 = vpop.f32.mrf.mxu0
    %211 = vmatprep.mubr.f32.mxu0 0.0
    %212 = vmatmul.mubr.f32.gmra.mxu0 %v139
    %v213 = vpop.f32.mrf.mxu0
    %v214 = vadd.f32 0.0, %v213
    %v215 = vpop.f32.mrf.mxu0
    %216 = vdwg.mxu0
    %v217 = vmul.f32 %v209, 2.0
    %v218 = vmul.f32 %v214, 2.0
    %v219 = vsub.f32 %v217, %v65
    %v220 = vsub.f32 %v218, %v66
    %221 = vmatprep.subr.mxu0 0.0
    %222 = vmatpush1.msra.mxu0 %v64
    %223 = vmatprep.subr.mxu0 0.0
    %224 = vmatpush1.msra.mxu0 %v63
    %225 = vmatprep.subr.mxu0 0.0
    %226 = vmatpush1.msra.mxu0 %v62
    %227 = vmatprep.subr.mxu0 0.0
    %228 = vmatpush1.msra.mxu0 %v61
    %229 = vmatprep.subr.mxu0 0.0
    %230 = vmatpush1.msra.mxu0 %v60
    %231 = vmatprep.subr.mxu0 0.0
    %232 = vmatpush1.msra.mxu0 %v59
    %233 = vmatprep.subr.mxu0 0.0
    %234 = vmatpush1.msra.mxu0 %v58
    %235 = vmatprep.subr.mxu0 0.0
    %236 = vmatpush1.msra.mxu0 %v57
    %237 = vmatprep.subr.mxu0 0.0
    %238 = vmatpush1.msra.mxu0 %v56
    %239 = vmatprep.subr.mxu0 0.0
    %240 = vmatpush1.msra.mxu0 %v55
    %241 = vmatprep.subr.mxu0 0.0
    %242 = vmatpush1.msra.mxu0 %v54
    %243 = vmatprep.subr.mxu0 0.0
    %244 = vmatpush1.msra.mxu0 %v53
    %245 = vmatprep.subr.mxu0 0.0
    %246 = vmatpush1.msra.mxu0 %v52
    %247 = vmatprep.subr.mxu0 0.0
    %248 = vmatpush1.msra.mxu0 %v51
    %249 = vmatprep.subr.mxu0 0.0
    %250 = vmatpush1.msra.mxu0 %v50
    %251 = vmatprep.subr.mxu0 0.0
    %252 = vmatpush1.msra.mxu0 %v49
    %253 = vmatprep.subr.mxu0 0.0
    %254 = vmatpush2.msra.mxu0 0.0
    %255 = vmatprep.subr.mxu0 0.0
    %256 = vmatpush2.msra.mxu0 0.0
    %257 = vmatprep.subr.mxu0 0.0
    %258 = vmatpush2.msra.mxu0 0.0
    %259 = vmatprep.subr.mxu0 0.0
    %260 = vmatpush2.msra.mxu0 0.0
    %261 = vmatprep.subr.mxu0 0.0
    %262 = vmatpush2.msra.mxu0 0.0
    %263 = vmatprep.subr.mxu0 0.0
    %264 = vmatpush2.msra.mxu0 0.0
    %265 = vmatprep.subr.mxu0 0.0
    %266 = vmatpush2.msra.mxu0 0.0
    %267 = vmatprep.subr.mxu0 0.0
    %268 = vmatpush2.msra.mxu0 0.0
    %269 = vmatprep.subr.mxu0 0.0
    %270 = vmatpush2.msra.mxu0 0.0
    %271 = vmatprep.subr.mxu0 0.0
    %272 = vmatpush2.msra.mxu0 0.0
    %273 = vmatprep.subr.mxu0 0.0
    %274 = vmatpush2.msra.mxu0 0.0
    %275 = vmatprep.subr.mxu0 0.0
    %276 = vmatpush2.msra.mxu0 0.0
    %277 = vmatprep.subr.mxu0 0.0
    %278 = vmatpush2.msra.mxu0 0.0
    %279 = vmatprep.subr.mxu0 0.0
    %280 = vmatpush2.msra.mxu0 0.0
    %281 = vmatprep.subr.mxu0 0.0
    %282 = vmatpush2.msra.mxu0 0.0
    %283 = vmatprep.subr.mxu0 0.0
    %284 = vmatpush2.msra.mxu0 0.0
    %285 = vmatprep.mubr.f32.mxu0 0.0
    %286 = vmatmul.mubr.f32.gmra.mxu0 %v134
    %v287 = vpop.f32.mrf.mxu0
    %v288 = vadd.f32 0.0, %v287
    %v289 = vpop.f32.mrf.mxu0
    %290 = vmatprep.mubr.f32.mxu0 0.0
    %291 = vmatmul.mubr.f32.gmra.mxu0 %v139
    %v292 = vpop.f32.mrf.mxu0
    %v293 = vadd.f32 0.0, %v292
    %v294 = vpop.f32.mrf.mxu0
    %295 = vdwg.mxu0
    %296 = vmatprep.subr.mxu0 0.0
    %297 = vmatpush1.msra.mxu0 %v64
    %298 = vmatprep.subr.mxu0 0.0
    %299 = vmatpush1.msra.mxu0 %v63
    %300 = vmatprep.subr.mxu0 0.0
    %301 = vmatpush1.msra.mxu0 %v62
    %302 = vmatprep.subr.mxu0 0.0
    %303 = vmatpush1.msra.mxu0 %v61
    %304 = vmatprep.subr.mxu0 0.0
    %305 = vmatpush1.msra.mxu0 %v60
    %306 = vmatprep.subr.mxu0 0.0
    %307 = vmatpush1.msra.mxu0 %v59
    %308 = vmatprep.subr.mxu0 0.0
    %309 = vmatpush1.msra.mxu0 %v58
    %310 = vmatprep.subr.mxu0 0.0
    %311 = vmatpush1.msra.mxu0 %v57
    %312 = vmatprep.subr.mxu0 0.0
    %313 = vmatpush1.msra.mxu0 %v56
    %314 = vmatprep.subr.mxu0 0.0
    %315 = vmatpush1.msra.mxu0 %v55
    %316 = vmatprep.subr.mxu0 0.0
    %317 = vmatpush1.msra.mxu0 %v54
    %318 = vmatprep.subr.mxu0 0.0
    %319 = vmatpush1.msra.mxu0 %v53
    %320 = vmatprep.subr.mxu0 0.0
    %321 = vmatpush1.msra.mxu0 %v52
    %322 = vmatprep.subr.mxu0 0.0
    %323 = vmatpush1.msra.mxu0 %v51
    %324 = vmatprep.subr.mxu0 0.0
    %325 = vmatpush1.msra.mxu0 %v50
    %326 = vmatprep.subr.mxu0 0.0
    %327 = vmatpush1.msra.mxu0 %v49
    %328 = vmatprep.subr.mxu0 0.0
    %329 = vmatpush2.msra.mxu0 0.0
    %330 = vmatprep.subr.mxu0 0.0
    %331 = vmatpush2.msra.mxu0 0.0
    %332 = vmatprep.subr.mxu0 0.0
    %333 = vmatpush2.msra.mxu0 0.0
    %334 = vmatprep.subr.mxu0 0.0
    %335 = vmatpush2.msra.mxu0 0.0
    %336 = vmatprep.subr.mxu0 0.0
    %337 = vmatpush2.msra.mxu0 0.0
    %338 = vmatprep.subr.mxu0 0.0
    %339 = vmatpush2.msra.mxu0 0.0
    %340 = vmatprep.subr.mxu0 0.0
    %341 = vmatpush2.msra.mxu0 0.0
    %342 = vmatprep.subr.mxu0 0.0
    %343 = vmatpush2.msra.mxu0 0.0
    %344 = vmatprep.subr.mxu0 0.0
    %345 = vmatpush2.msra.mxu0 0.0
    %346 = vmatprep.subr.mxu0 0.0
    %347 = vmatpush2.msra.mxu0 0.0
    %348 = vmatprep.subr.mxu0 0.0
    %349 = vmatpush2.msra.mxu0 0.0
    %350 = vmatprep.subr.mxu0 0.0
    %351 = vmatpush2.msra.mxu0 0.0
    %352 = vmatprep.subr.mxu0 0.0
    %353 = vmatpush2.msra.mxu0 0.0
    %354 = vmatprep.subr.mxu0 0.0
    %355 = vmatpush2.msra.mxu0 0.0
    %356 = vmatprep.subr.mxu0 0.0
    %357 = vmatpush2.msra.mxu0 0.0
    %358 = vmatprep.subr.mxu0 0.0
    %359 = vmatpush2.msra.mxu0 0.0
    %360 = vmatprep.mubr.f32.mxu0 0.0
    %361 = vmatmul.mubr.f32.gmra.mxu0 %v288
    %v362 = vpop.f32.mrf.mxu0
    %v363 = vadd.f32 0.0, %v362
    %v364 = vpop.f32.mrf.mxu0
    %365 = vmatprep.mubr.f32.mxu0 0.0
    %366 = vmatmul.mubr.f32.gmra.mxu0 %v293
    %v367 = vpop.f32.mrf.mxu0
    %v368 = vadd.f32 0.0, %v367
    %v369 = vpop.f32.mrf.mxu0
    %370 = vdwg.mxu0
    %v371 = vmul.f32 %v363, 2.0
    %v372 = vmul.f32 %v368, 2.0
    %v373 = vsub.f32 %v371, %v134
    %v374 = vsub.f32 %v372, %v139
    %v375 = vld [vmem:[%s3] sm:$0xff]
    %v376 = vld [vmem:[%s3 + $0x8] sm:$0xff]
    %v377 = vld [vmem:[%s3 + $0x10] sm:$0xff]
    %v378 = vld [vmem:[%s3 + $0x18] sm:$0xff]
    %v379 = vld [vmem:[%s3 + $0x20] sm:$0xff]
    %v380 = vld [vmem:[%s3 + $0x28] sm:$0xff]
    %v381 = vld [vmem:[%s3 + $0x30] sm:$0xff]
    %v382 = vld [vmem:[%s3 + $0x38] sm:$0xff]
    %v383 = vld [vmem:[%s4] sm:$0xff]
    %v384 = vld [vmem:[%s4 + $0x8] sm:$0xff]
    %v385 = vld [vmem:[%s4 + $0x10] sm:$0xff]
    %v386 = vld [vmem:[%s4 + $0x18] sm:$0xff]
    %v387 = vld [vmem:[%s4 + $0x20] sm:$0xff]
    %v388 = vld [vmem:[%s4 + $0x28] sm:$0xff]
    %v389 = vld [vmem:[%s4 + $0x30] sm:$0xff]
    %v390 = vld [vmem:[%s4 + $0x38] sm:$0xff]
    %392 = vset.pattern.permute.xlu0 0
    %393 = vperm.xlu0 %392, %v383
    %v394 = vpop.permute.xlu0 %393
    %397 = vset.pattern.permute.xlu0 0
    %398 = vperm.xlu0 %397, %v384
    %v399 = vpop.permute.xlu0 %398
    %402 = vset.pattern.permute.xlu0 0
    %403 = vperm.xlu0 %402, %v385
    %v404 = vpop.permute.xlu0 %403
    %407 = vset.pattern.permute.xlu0 0
    %408 = vperm.xlu0 %407, %v386
    %v409 = vpop.permute.xlu0 %408
    %412 = vset.pattern.permute.xlu0 0
    %413 = vperm.xlu0 %412, %v387
    %v414 = vpop.permute.xlu0 %413
    %417 = vset.pattern.permute.xlu0 0
    %418 = vperm.xlu0 %417, %v388
    %v419 = vpop.permute.xlu0 %418
    %422 = vset.pattern.permute.xlu0 0
    %423 = vperm.xlu0 %422, %v389
    %v424 = vpop.permute.xlu0 %423
    %427 = vset.pattern.permute.xlu0 0
    %428 = vperm.xlu0 %427, %v390
    %v429 = vpop.permute.xlu0 %428
    %vm431 = vcmask 654336
    %v433 = vsel %vm431, %v375, 0
    %v436 = vsel %vm431, %v376, 0
    %v439 = vsel %vm431, %v377, 0
    %v442 = vsel %vm431, %v378, 0
    %v445 = vsel %vm431, %v379, 0
    %v448 = vsel %vm431, %v380, 0
    %v451 = vsel %vm431, %v381, 0
    %v454 = vsel %vm431, %v382, 0
    %456 = vmatprep.subr.mxu0 0.0
    %457 = vmatpush1.msra.mxu0 0.0
    %458 = vmatprep.subr.mxu0 0.0
    %459 = vmatpush1.msra.mxu0 0.0
    %460 = vmatprep.subr.mxu0 0.0
    %461 = vmatpush1.msra.mxu0 0.0
    %462 = vmatprep.subr.mxu0 0.0
    %463 = vmatpush1.msra.mxu0 0.0
    %464 = vmatprep.subr.mxu0 0.0
    %465 = vmatpush1.msra.mxu0 0.0
    %466 = vmatprep.subr.mxu0 0.0
    %467 = vmatpush1.msra.mxu0 0.0
    %468 = vmatprep.subr.mxu0 0.0
    %469 = vmatpush1.msra.mxu0 %v374
    %470 = vmatprep.subr.mxu0 0.0
    %471 = vmatpush1.msra.mxu0 %v373
    %472 = vmatprep.subr.mxu0 0.0
    %473 = vmatpush1.msra.mxu0 %v293
    %474 = vmatprep.subr.mxu0 0.0
    %475 = vmatpush1.msra.mxu0 %v288
    %476 = vmatprep.subr.mxu0 0.0
    %477 = vmatpush1.msra.mxu0 %v220
    %478 = vmatprep.subr.mxu0 0.0
    %479 = vmatpush1.msra.mxu0 %v219
    %480 = vmatprep.subr.mxu0 0.0
    %481 = vmatpush1.msra.mxu0 %v139
    %482 = vmatprep.subr.mxu0 0.0
    %483 = vmatpush1.msra.mxu0 %v134
    %484 = vmatprep.subr.mxu0 0.0
    %485 = vmatpush1.msra.mxu0 %v66
    %486 = vmatprep.subr.mxu0 0.0
    %487 = vmatpush1.msra.mxu0 %v65
    %488 = vmatprep.subr.mxu0 0.0
    %489 = vmatpush2.msra.mxu0 0.0
    %490 = vmatprep.subr.mxu0 0.0
    %491 = vmatpush2.msra.mxu0 0.0
    %492 = vmatprep.subr.mxu0 0.0
    %493 = vmatpush2.msra.mxu0 0.0
    %494 = vmatprep.subr.mxu0 0.0
    %495 = vmatpush2.msra.mxu0 0.0
    %496 = vmatprep.subr.mxu0 0.0
    %497 = vmatpush2.msra.mxu0 0.0
    %498 = vmatprep.subr.mxu0 0.0
    %499 = vmatpush2.msra.mxu0 0.0
    %500 = vmatprep.subr.mxu0 0.0
    %501 = vmatpush2.msra.mxu0 0.0
    %502 = vmatprep.subr.mxu0 0.0
    %503 = vmatpush2.msra.mxu0 0.0
    %504 = vmatprep.subr.mxu0 0.0
    %505 = vmatpush2.msra.mxu0 0.0
    %506 = vmatprep.subr.mxu0 0.0
    %507 = vmatpush2.msra.mxu0 0.0
    %508 = vmatprep.subr.mxu0 0.0
    %509 = vmatpush2.msra.mxu0 0.0
    %510 = vmatprep.subr.mxu0 0.0
    %511 = vmatpush2.msra.mxu0 0.0
    %512 = vmatprep.subr.mxu0 0.0
    %513 = vmatpush2.msra.mxu0 0.0
    %514 = vmatprep.subr.mxu0 0.0
    %515 = vmatpush2.msra.mxu0 0.0
    %516 = vmatprep.subr.mxu0 0.0
    %517 = vmatpush2.msra.mxu0 0.0
    %518 = vmatprep.subr.mxu0 0.0
    %519 = vmatpush2.msra.mxu0 0.0
    %520 = vmatprep.mubr.f32.mxu0 0.0
    %521 = vmatmul.mubr.f32.gmra.mxu0 %v433
    %v522 = vpop.f32.mrf.mxu0
    %v523 = vadd.f32 %v394, %v522
    %v524 = vpop.f32.mrf.mxu0
    %525 = vmatprep.mubr.f32.mxu0 0.0
    %526 = vmatmul.mubr.f32.gmra.mxu0 %v436
    %v527 = vpop.f32.mrf.mxu0
    %v528 = vadd.f32 %v399, %v527
    %v529 = vpop.f32.mrf.mxu0
    %530 = vmatprep.mubr.f32.mxu0 0.0
    %531 = vmatmul.mubr.f32.gmra.mxu0 %v439
    %v532 = vpop.f32.mrf.mxu0
    %v533 = vadd.f32 %v404, %v532
    %v534 = vpop.f32.mrf.mxu0
    %535 = vmatprep.mubr.f32.mxu0 0.0
    %536 = vmatmul.mubr.f32.gmra.mxu0 %v442
    %v537 = vpop.f32.mrf.mxu0
    %v538 = vadd.f32 %v409, %v537
    %v539 = vpop.f32.mrf.mxu0
    %540 = vmatprep.mubr.f32.mxu0 0.0
    %541 = vmatmul.mubr.f32.gmra.mxu0 %v445
    %v542 = vpop.f32.mrf.mxu0
    %v543 = vadd.f32 %v414, %v542
    %v544 = vpop.f32.mrf.mxu0
    %545 = vmatprep.mubr.f32.mxu0 0.0
    %546 = vmatmul.mubr.f32.gmra.mxu0 %v448
    %v547 = vpop.f32.mrf.mxu0
    %v548 = vadd.f32 %v419, %v547
    %v549 = vpop.f32.mrf.mxu0
    %550 = vmatprep.mubr.f32.mxu0 0.0
    %551 = vmatmul.mubr.f32.gmra.mxu0 %v451
    %v552 = vpop.f32.mrf.mxu0
    %v553 = vadd.f32 %v424, %v552
    %v554 = vpop.f32.mrf.mxu0
    %555 = vmatprep.mubr.f32.mxu0 0.0
    %556 = vmatmul.mubr.f32.gmra.mxu0 %v454
    %v557 = vpop.f32.mrf.mxu0
    %v558 = vadd.f32 %v429, %v557
    %v559 = vpop.f32.mrf.mxu0
    %560 = vdwg.mxu0
    %v561 = vmax.f32 %v523, 0.0
    %v562 = vmax.f32 %v528, 0.0
    %v563 = vmax.f32 %v533, 0.0
    %v564 = vmax.f32 %v538, 0.0
    %v565 = vmax.f32 %v543, 0.0
    %v566 = vmax.f32 %v548, 0.0
    %v567 = vmax.f32 %v553, 0.0
    %v568 = vmax.f32 %v558, 0.0
    %569 = vmatprep.subr.mxu0 0.0
    %570 = vmatpush1.msra.mxu0 %v48
    %571 = vmatprep.subr.mxu0 0.0
    %572 = vmatpush1.msra.mxu0 %v47
    %573 = vmatprep.subr.mxu0 0.0
    %574 = vmatpush1.msra.mxu0 %v46
    %575 = vmatprep.subr.mxu0 0.0
    %576 = vmatpush1.msra.mxu0 %v45
    %577 = vmatprep.subr.mxu0 0.0
    %578 = vmatpush1.msra.mxu0 %v44
    %579 = vmatprep.subr.mxu0 0.0
    %580 = vmatpush1.msra.mxu0 %v43
    %581 = vmatprep.subr.mxu0 0.0
    %582 = vmatpush1.msra.mxu0 %v42
    %583 = vmatprep.subr.mxu0 0.0
    %584 = vmatpush1.msra.mxu0 %v41
    %585 = vmatprep.subr.mxu0 0.0
    %586 = vmatpush1.msra.mxu0 %v40
    %587 = vmatprep.subr.mxu0 0.0
    %588 = vmatpush1.msra.mxu0 %v39
    %589 = vmatprep.subr.mxu0 0.0
    %590 = vmatpush1.msra.mxu0 %v38
    %591 = vmatprep.subr.mxu0 0.0
    %592 = vmatpush1.msra.mxu0 %v37
    %593 = vmatprep.subr.mxu0 0.0
    %594 = vmatpush1.msra.mxu0 %v36
    %595 = vmatprep.subr.mxu0 0.0
    %596 = vmatpush1.msra.mxu0 %v35
    %597 = vmatprep.subr.mxu0 0.0
    %598 = vmatpush1.msra.mxu0 %v34
    %599 = vmatprep.subr.mxu0 0.0
    %600 = vmatpush1.msra.mxu0 %v33
    %601 = vmatprep.subr.mxu0 0.0
    %602 = vmatpush2.msra.mxu0 0.0
    %603 = vmatprep.subr.mxu0 0.0
    %604 = vmatpush2.msra.mxu0 0.0
    %605 = vmatprep.subr.mxu0 0.0
    %606 = vmatpush2.msra.mxu0 0.0
    %607 = vmatprep.subr.mxu0 0.0
    %608 = vmatpush2.msra.mxu0 0.0
    %609 = vmatprep.subr.mxu0 0.0
    %610 = vmatpush2.msra.mxu0 0.0
    %611 = vmatprep.subr.mxu0 0.0
    %612 = vmatpush2.msra.mxu0 0.0
    %613 = vmatprep.subr.mxu0 0.0
    %614 = vmatpush2.msra.mxu0 0.0
    %615 = vmatprep.subr.mxu0 0.0
    %616 = vmatpush2.msra.mxu0 0.0
    %617 = vmatprep.subr.mxu0 0.0
    %618 = vmatpush2.msra.mxu0 0.0
    %619 = vmatprep.subr.mxu0 0.0
    %620 = vmatpush2.msra.mxu0 0.0
    %621 = vmatprep.subr.mxu0 0.0
    %622 = vmatpush2.msra.mxu0 0.0
    %623 = vmatprep.subr.mxu0 0.0
    %624 = vmatpush2.msra.mxu0 0.0
    %625 = vmatprep.subr.mxu0 0.0
    %626 = vmatpush2.msra.mxu0 0.0
    %627 = vmatprep.subr.mxu0 0.0
    %628 = vmatpush2.msra.mxu0 0.0
    %629 = vmatprep.subr.mxu0 0.0
    %630 = vmatpush2.msra.mxu0 0.0
    %631 = vmatprep.subr.mxu0 0.0
    %632 = vmatpush2.msra.mxu0 0.0
    %633 = vmatprep.mubr.f32.mxu0 0.0
    %634 = vmatmul.mubr.f32.gmra.mxu0 %v561
    %v635 = vpop.f32.mrf.mxu0
    %v636 = vadd.f32 0.0, %v635
    %v637 = vpop.f32.mrf.mxu0
    %638 = vmatprep.mubr.f32.mxu0 0.0
    %639 = vmatmul.mubr.f32.gmra.mxu0 %v562
    %v640 = vpop.f32.mrf.mxu0
    %v641 = vadd.f32 0.0, %v640
    %v642 = vpop.f32.mrf.mxu0
    %643 = vmatprep.mubr.f32.mxu0 0.0
    %644 = vmatmul.mubr.f32.gmra.mxu0 %v563
    %v645 = vpop.f32.mrf.mxu0
    %v646 = vadd.f32 0.0, %v645
    %v647 = vpop.f32.mrf.mxu0
    %648 = vmatprep.mubr.f32.mxu0 0.0
    %649 = vmatmul.mubr.f32.gmra.mxu0 %v564
    %v650 = vpop.f32.mrf.mxu0
    %v651 = vadd.f32 0.0, %v650
    %v652 = vpop.f32.mrf.mxu0
    %653 = vmatprep.mubr.f32.mxu0 0.0
    %654 = vmatmul.mubr.f32.gmra.mxu0 %v565
    %v655 = vpop.f32.mrf.mxu0
    %v656 = vadd.f32 0.0, %v655
    %v657 = vpop.f32.mrf.mxu0
    %658 = vmatprep.mubr.f32.mxu0 0.0
    %659 = vmatmul.mubr.f32.gmra.mxu0 %v566
    %v660 = vpop.f32.mrf.mxu0
    %v661 = vadd.f32 0.0, %v660
    %v662 = vpop.f32.mrf.mxu0
    %663 = vmatprep.mubr.f32.mxu0 0.0
    %664 = vmatmul.mubr.f32.gmra.mxu0 %v567
    %v665 = vpop.f32.mrf.mxu0
    %v666 = vadd.f32 0.0, %v665
    %v667 = vpop.f32.mrf.mxu0
    %668 = vmatprep.mubr.f32.mxu0 0.0
    %669 = vmatmul.mubr.f32.gmra.mxu0 %v568
    %v670 = vpop.f32.mrf.mxu0
    %v671 = vadd.f32 0.0, %v670
    %v672 = vpop.f32.mrf.mxu0
    %673 = vdwg.mxu0
    %674 = vmatprep.subr.mxu0 0.0
    %675 = vmatpush1.msra.mxu0 %v48
    %676 = vmatprep.subr.mxu0 0.0
    %677 = vmatpush1.msra.mxu0 %v47
    %678 = vmatprep.subr.mxu0 0.0
    %679 = vmatpush1.msra.mxu0 %v46
    %680 = vmatprep.subr.mxu0 0.0
    %681 = vmatpush1.msra.mxu0 %v45
    %682 = vmatprep.subr.mxu0 0.0
    %683 = vmatpush1.msra.mxu0 %v44
    %684 = vmatprep.subr.mxu0 0.0
    %685 = vmatpush1.msra.mxu0 %v43
    %686 = vmatprep.subr.mxu0 0.0
    %687 = vmatpush1.msra.mxu0 %v42
    %688 = vmatprep.subr.mxu0 0.0
    %689 = vmatpush1.msra.mxu0 %v41
    %690 = vmatprep.subr.mxu0 0.0
    %691 = vmatpush1.msra.mxu0 %v40
    %692 = vmatprep.subr.mxu0 0.0
    %693 = vmatpush1.msra.mxu0 %v39
    %694 = vmatprep.subr.mxu0 0.0
    %695 = vmatpush1.msra.mxu0 %v38
    %696 = vmatprep.subr.mxu0 0.0
    %697 = vmatpush1.msra.mxu0 %v37
    %698 = vmatprep.subr.mxu0 0.0
    %699 = vmatpush1.msra.mxu0 %v36
    %700 = vmatprep.subr.mxu0 0.0
    %701 = vmatpush1.msra.mxu0 %v35
    %702 = vmatprep.subr.mxu0 0.0
    %703 = vmatpush1.msra.mxu0 %v34
    %704 = vmatprep.subr.mxu0 0.0
    %705 = vmatpush1.msra.mxu0 %v33
    %706 = vmatprep.subr.mxu0 0.0
    %707 = vmatpush2.msra.mxu0 0.0
    %708 = vmatprep.subr.mxu0 0.0
    %709 = vmatpush2.msra.mxu0 0.0
    %710 = vmatprep.subr.mxu0 0.0
    %711 = vmatpush2.msra.mxu0 0.0
    %712 = vmatprep.subr.mxu0 0.0
    %713 = vmatpush2.msra.mxu0 0.0
    %714 = vmatprep.subr.mxu0 0.0
    %715 = vmatpush2.msra.mxu0 0.0
    %716 = vmatprep.subr.mxu0 0.0
    %717 = vmatpush2.msra.mxu0 0.0
    %718 = vmatprep.subr.mxu0 0.0
    %719 = vmatpush2.msra.mxu0 0.0
    %720 = vmatprep.subr.mxu0 0.0
    %721 = vmatpush2.msra.mxu0 0.0
    %722 = vmatprep.subr.mxu0 0.0
    %723 = vmatpush2.msra.mxu0 0.0
    %724 = vmatprep.subr.mxu0 0.0
    %725 = vmatpush2.msra.mxu0 0.0
    %726 = vmatprep.subr.mxu0 0.0
    %727 = vmatpush2.msra.mxu0 0.0
    %728 = vmatprep.subr.mxu0 0.0
    %729 = vmatpush2.msra.mxu0 0.0
    %730 = vmatprep.subr.mxu0 0.0
    %731 = vmatpush2.msra.mxu0 0.0
    %732 = vmatprep.subr.mxu0 0.0
    %733 = vmatpush2.msra.mxu0 0.0
    %734 = vmatprep.subr.mxu0 0.0
    %735 = vmatpush2.msra.mxu0 0.0
    %736 = vmatprep.subr.mxu0 0.0
    %737 = vmatpush2.msra.mxu0 0.0
    %738 = vmatprep.mubr.f32.mxu0 0.0
    %739 = vmatmul.mubr.f32.gmra.mxu0 %v636
    %v740 = vpop.f32.mrf.mxu0
    %v741 = vadd.f32 0.0, %v740
    %v742 = vpop.f32.mrf.mxu0
    %743 = vmatprep.mubr.f32.mxu0 0.0
    %744 = vmatmul.mubr.f32.gmra.mxu0 %v641
    %v745 = vpop.f32.mrf.mxu0
    %v746 = vadd.f32 0.0, %v745
    %v747 = vpop.f32.mrf.mxu0
    %748 = vmatprep.mubr.f32.mxu0 0.0
    %749 = vmatmul.mubr.f32.gmra.mxu0 %v646
    %v750 = vpop.f32.mrf.mxu0
    %v751 = vadd.f32 0.0, %v750
    %v752 = vpop.f32.mrf.mxu0
    %753 = vmatprep.mubr.f32.mxu0 0.0
    %754 = vmatmul.mubr.f32.gmra.mxu0 %v651
    %v755 = vpop.f32.mrf.mxu0
    %v756 = vadd.f32 0.0, %v755
    %v757 = vpop.f32.mrf.mxu0
    %758 = vmatprep.mubr.f32.mxu0 0.0
    %759 = vmatmul.mubr.f32.gmra.mxu0 %v656
    %v760 = vpop.f32.mrf.mxu0
    %v761 = vadd.f32 0.0, %v760
    %v762 = vpop.f32.mrf.mxu0
    %763 = vmatprep.mubr.f32.mxu0 0.0
    %764 = vmatmul.mubr.f32.gmra.mxu0 %v661
    %v765 = vpop.f32.mrf.mxu0
    %v766 = vadd.f32 0.0, %v765
    %v767 = vpop.f32.mrf.mxu0
    %768 = vmatprep.mubr.f32.mxu0 0.0
    %769 = vmatmul.mubr.f32.gmra.mxu0 %v666
    %v770 = vpop.f32.mrf.mxu0
    %v771 = vadd.f32 0.0, %v770
    %v772 = vpop.f32.mrf.mxu0
    %773 = vmatprep.mubr.f32.mxu0 0.0
    %774 = vmatmul.mubr.f32.gmra.mxu0 %v671
    %v775 = vpop.f32.mrf.mxu0
    %v776 = vadd.f32 0.0, %v775
    %v777 = vpop.f32.mrf.mxu0
    %778 = vdwg.mxu0
    %v779 = vmul.f32 %v741, 2.0
    %v780 = vmul.f32 %v746, 2.0
    %v781 = vmul.f32 %v751, 2.0
    %v782 = vmul.f32 %v756, 2.0
    %v783 = vmul.f32 %v761, 2.0
    %v784 = vmul.f32 %v766, 2.0
    %v785 = vmul.f32 %v771, 2.0
    %v786 = vmul.f32 %v776, 2.0
    %v787 = vsub.f32 %v779, %v561
    %v788 = vsub.f32 %v780, %v562
    %v789 = vsub.f32 %v781, %v563
    %v790 = vsub.f32 %v782, %v564
    %v791 = vsub.f32 %v783, %v565
    %v792 = vsub.f32 %v784, %v566
    %v793 = vsub.f32 %v785, %v567
    %v794 = vsub.f32 %v786, %v568
    %795 = vmatprep.subr.mxu0 0.0
    %796 = vmatpush1.msra.mxu0 %v64
    %797 = vmatprep.subr.mxu0 0.0
    %798 = vmatpush1.msra.mxu0 %v63
    %799 = vmatprep.subr.mxu0 0.0
    %800 = vmatpush1.msra.mxu0 %v62
    %801 = vmatprep.subr.mxu0 0.0
    %802 = vmatpush1.msra.mxu0 %v61
    %803 = vmatprep.subr.mxu0 0.0
    %804 = vmatpush1.msra.mxu0 %v60
    %805 = vmatprep.subr.mxu0 0.0
    %806 = vmatpush1.msra.mxu0 %v59
    %807 = vmatprep.subr.mxu0 0.0
    %808 = vmatpush1.msra.mxu0 %v58
    %809 = vmatprep.subr.mxu0 0.0
    %810 = vmatpush1.msra.mxu0 %v57
    %811 = vmatprep.subr.mxu0 0.0
    %812 = vmatpush1.msra.mxu0 %v56
    %813 = vmatprep.subr.mxu0 0.0
    %814 = vmatpush1.msra.mxu0 %v55
    %815 = vmatprep.subr.mxu0 0.0
    %816 = vmatpush1.msra.mxu0 %v54
    %817 = vmatprep.subr.mxu0 0.0
    %818 = vmatpush1.msra.mxu0 %v53
    %819 = vmatprep.subr.mxu0 0.0
    %820 = vmatpush1.msra.mxu0 %v52
    %821 = vmatprep.subr.mxu0 0.0
    %822 = vmatpush1.msra.mxu0 %v51
    %823 = vmatprep.subr.mxu0 0.0
    %824 = vmatpush1.msra.mxu0 %v50
    %825 = vmatprep.subr.mxu0 0.0
    %826 = vmatpush1.msra.mxu0 %v49
    %827 = vmatprep.subr.mxu0 0.0
    %828 = vmatpush2.msra.mxu0 0.0
    %829 = vmatprep.subr.mxu0 0.0
    %830 = vmatpush2.msra.mxu0 0.0
    %831 = vmatprep.subr.mxu0 0.0
    %832 = vmatpush2.msra.mxu0 0.0
    %833 = vmatprep.subr.mxu0 0.0
    %834 = vmatpush2.msra.mxu0 0.0
    %835 = vmatprep.subr.mxu0 0.0
    %836 = vmatpush2.msra.mxu0 0.0
    %837 = vmatprep.subr.mxu0 0.0
    %838 = vmatpush2.msra.mxu0 0.0
    %839 = vmatprep.subr.mxu0 0.0
    %840 = vmatpush2.msra.mxu0 0.0
    %841 = vmatprep.subr.mxu0 0.0
    %842 = vmatpush2.msra.mxu0 0.0
    %843 = vmatprep.subr.mxu0 0.0
    %844 = vmatpush2.msra.mxu0 0.0
    %845 = vmatprep.subr.mxu0 0.0
    %846 = vmatpush2.msra.mxu0 0.0
    %847 = vmatprep.subr.mxu0 0.0
    %848 = vmatpush2.msra.mxu0 0.0
    %849 = vmatprep.subr.mxu0 0.0
    %850 = vmatpush2.msra.mxu0 0.0
    %851 = vmatprep.subr.mxu0 0.0
    %852 = vmatpush2.msra.mxu0 0.0
    %853 = vmatprep.subr.mxu0 0.0
    %854 = vmatpush2.msra.mxu0 0.0
    %855 = vmatprep.subr.mxu0 0.0
    %856 = vmatpush2.msra.mxu0 0.0
    %857 = vmatprep.subr.mxu0 0.0
    %858 = vmatpush2.msra.mxu0 0.0
    %859 = vmatprep.mubr.f32.mxu0 0.0
    %860 = vmatmul.mubr.f32.gmra.mxu0 %v636
    %v861 = vpop.f32.mrf.mxu0
    %v862 = vadd.f32 0.0, %v861
    %v863 = vpop.f32.mrf.mxu0
    %864 = vmatprep.mubr.f32.mxu0 0.0
    %865 = vmatmul.mubr.f32.gmra.mxu0 %v641
    %v866 = vpop.f32.mrf.mxu0
    %v867 = vadd.f32 0.0, %v866
    %v868 = vpop.f32.mrf.mxu0
    %869 = vmatprep.mubr.f32.mxu0 0.0
    %870 = vmatmul.mubr.f32.gmra.mxu0 %v646
    %v871 = vpop.f32.mrf.mxu0
    %v872 = vadd.f32 0.0, %v871
    %v873 = vpop.f32.mrf.mxu0
    %874 = vmatprep.mubr.f32.mxu0 0.0
    %875 = vmatmul.mubr.f32.gmra.mxu0 %v651
    %v876 = vpop.f32.mrf.mxu0
    %v877 = vadd.f32 0.0, %v876
    %v878 = vpop.f32.mrf.mxu0
    %879 = vmatprep.mubr.f32.mxu0 0.0
    %880 = vmatmul.mubr.f32.gmra.mxu0 %v656
    %v881 = vpop.f32.mrf.mxu0
    %v882 = vadd.f32 0.0, %v881
    %v883 = vpop.f32.mrf.mxu0
    %884 = vmatprep.mubr.f32.mxu0 0.0
    %885 = vmatmul.mubr.f32.gmra.mxu0 %v661
    %v886 = vpop.f32.mrf.mxu0
    %v887 = vadd.f32 0.0, %v886
    %v888 = vpop.f32.mrf.mxu0
    %889 = vmatprep.mubr.f32.mxu0 0.0
    %890 = vmatmul.mubr.f32.gmra.mxu0 %v666
    %v891 = vpop.f32.mrf.mxu0
    %v892 = vadd.f32 0.0, %v891
    %v893 = vpop.f32.mrf.mxu0
    %894 = vmatprep.mubr.f32.mxu0 0.0
    %895 = vmatmul.mubr.f32.gmra.mxu0 %v671
    %v896 = vpop.f32.mrf.mxu0
    %v897 = vadd.f32 0.0, %v896
    %v898 = vpop.f32.mrf.mxu0
    %899 = vdwg.mxu0
    %900 = vmatprep.subr.mxu0 0.0
    %901 = vmatpush1.msra.mxu0 %v64
    %902 = vmatprep.subr.mxu0 0.0
    %903 = vmatpush1.msra.mxu0 %v63
    %904 = vmatprep.subr.mxu0 0.0
    %905 = vmatpush1.msra.mxu0 %v62
    %906 = vmatprep.subr.mxu0 0.0
    %907 = vmatpush1.msra.mxu0 %v61
    %908 = vmatprep.subr.mxu0 0.0
    %909 = vmatpush1.msra.mxu0 %v60
    %910 = vmatprep.subr.mxu0 0.0
    %911 = vmatpush1.msra.mxu0 %v59
    %912 = vmatprep.subr.mxu0 0.0
    %913 = vmatpush1.msra.mxu0 %v58
    %914 = vmatprep.subr.mxu0 0.0
    %915 = vmatpush1.msra.mxu0 %v57
    %916 = vmatprep.subr.mxu0 0.0
    %917 = vmatpush1.msra.mxu0 %v56
    %918 = vmatprep.subr.mxu0 0.0
    %919 = vmatpush1.msra.mxu0 %v55
    %920 = vmatprep.subr.mxu0 0.0
    %921 = vmatpush1.msra.mxu0 %v54
    %922 = vmatprep.subr.mxu0 0.0
    %923 = vmatpush1.msra.mxu0 %v53
    %924 = vmatprep.subr.mxu0 0.0
    %925 = vmatpush1.msra.mxu0 %v52
    %926 = vmatprep.subr.mxu0 0.0
    %927 = vmatpush1.msra.mxu0 %v51
    %928 = vmatprep.subr.mxu0 0.0
    %929 = vmatpush1.msra.mxu0 %v50
    %930 = vmatprep.subr.mxu0 0.0
    %931 = vmatpush1.msra.mxu0 %v49
    %932 = vmatprep.subr.mxu0 0.0
    %933 = vmatpush2.msra.mxu0 0.0
    %934 = vmatprep.subr.mxu0 0.0
    %935 = vmatpush2.msra.mxu0 0.0
    %936 = vmatprep.subr.mxu0 0.0
    %937 = vmatpush2.msra.mxu0 0.0
    %938 = vmatprep.subr.mxu0 0.0
    %939 = vmatpush2.msra.mxu0 0.0
    %940 = vmatprep.subr.mxu0 0.0
    %941 = vmatpush2.msra.mxu0 0.0
    %942 = vmatprep.subr.mxu0 0.0
    %943 = vmatpush2.msra.mxu0 0.0
    %944 = vmatprep.subr.mxu0 0.0
    %945 = vmatpush2.msra.mxu0 0.0
    %946 = vmatprep.subr.mxu0 0.0
    %947 = vmatpush2.msra.mxu0 0.0
    %948 = vmatprep.subr.mxu0 0.0
    %949 = vmatpush2.msra.mxu0 0.0
    %950 = vmatprep.subr.mxu0 0.0
    %951 = vmatpush2.msra.mxu0 0.0
    %952 = vmatprep.subr.mxu0 0.0
    %953 = vmatpush2.msra.mxu0 0.0
    %954 = vmatprep.subr.mxu0 0.0
    %955 = vmatpush2.msra.mxu0 0.0
    %956 = vmatprep.subr.mxu0 0.0
    %957 = vmatpush2.msra.mxu0 0.0
    %958 = vmatprep.subr.mxu0 0.0
    %959 = vmatpush2.msra.mxu0 0.0
    %960 = vmatprep.subr.mxu0 0.0
    %961 = vmatpush2.msra.mxu0 0.0
    %962 = vmatprep.subr.mxu0 0.0
    %963 = vmatpush2.msra.mxu0 0.0
    %964 = vmatprep.mubr.f32.mxu0 0.0
    %965 = vmatmul.mubr.f32.gmra.mxu0 %v862
    %v966 = vpop.f32.mrf.mxu0
    %v967 = vadd.f32 0.0, %v966
    %v968 = vpop.f32.mrf.mxu0
    %969 = vmatprep.mubr.f32.mxu0 0.0
    %970 = vmatmul.mubr.f32.gmra.mxu0 %v867
    %v971 = vpop.f32.mrf.mxu0
    %v972 = vadd.f32 0.0, %v971
    %v973 = vpop.f32.mrf.mxu0
    %974 = vmatprep.mubr.f32.mxu0 0.0
    %975 = vmatmul.mubr.f32.gmra.mxu0 %v872
    %v976 = vpop.f32.mrf.mxu0
    %v977 = vadd.f32 0.0, %v976
    %v978 = vpop.f32.mrf.mxu0
    %979 = vmatprep.mubr.f32.mxu0 0.0
    %980 = vmatmul.mubr.f32.gmra.mxu0 %v877
    %v981 = vpop.f32.mrf.mxu0
    %v982 = vadd.f32 0.0, %v981
    %v983 = vpop.f32.mrf.mxu0
    %984 = vmatprep.mubr.f32.mxu0 0.0
    %985 = vmatmul.mubr.f32.gmra.mxu0 %v882
    %v986 = vpop.f32.mrf.mxu0
    %v987 = vadd.f32 0.0, %v986
    %v988 = vpop.f32.mrf.mxu0
    %989 = vmatprep.mubr.f32.mxu0 0.0
    %990 = vmatmul.mubr.f32.gmra.mxu0 %v887
    %v991 = vpop.f32.mrf.mxu0
    %v992 = vadd.f32 0.0, %v991
    %v993 = vpop.f32.mrf.mxu0
    %994 = vmatprep.mubr.f32.mxu0 0.0
    %995 = vmatmul.mubr.f32.gmra.mxu0 %v892
    %v996 = vpop.f32.mrf.mxu0
    %v997 = vadd.f32 0.0, %v996
    %v998 = vpop.f32.mrf.mxu0
    %999 = vmatprep.mubr.f32.mxu0 0.0
    %1000 = vmatmul.mubr.f32.gmra.mxu0 %v897
    %v1001 = vpop.f32.mrf.mxu0
    %v1002 = vadd.f32 0.0, %v1001
    %v1003 = vpop.f32.mrf.mxu0
    %1004 = vdwg.mxu0
    %v1005 = vmul.f32 %v967, 2.0
    %v1006 = vmul.f32 %v972, 2.0
    %v1007 = vmul.f32 %v977, 2.0
    %v1008 = vmul.f32 %v982, 2.0
    %v1009 = vmul.f32 %v987, 2.0
    %v1010 = vmul.f32 %v992, 2.0
    %v1011 = vmul.f32 %v997, 2.0
    %v1012 = vmul.f32 %v1002, 2.0
    %v1013 = vsub.f32 %v1005, %v636
    %v1014 = vsub.f32 %v1006, %v641
    %v1015 = vsub.f32 %v1007, %v646
    %v1016 = vsub.f32 %v1008, %v651
    %v1017 = vsub.f32 %v1009, %v656
    %v1018 = vsub.f32 %v1010, %v661
    %v1019 = vsub.f32 %v1011, %v666
    %v1020 = vsub.f32 %v1012, %v671
    %v1021 = vld [vmem:[%s5] sm:$0xff]
    %v1022 = vld [vmem:[%s5 + $0x8] sm:$0xff]
    %v1023 = vld [vmem:[%s5 + $0x10] sm:$0xff]
    %v1024 = vld [vmem:[%s5 + $0x18] sm:$0xff]
    %v1025 = vld [vmem:[%s5 + $0x20] sm:$0xff]
    %v1026 = vld [vmem:[%s5 + $0x28] sm:$0xff]
    %v1027 = vld [vmem:[%s5 + $0x30] sm:$0xff]
    %v1028 = vld [vmem:[%s5 + $0x38] sm:$0xff]
    %v1029 = vld [vmem:[%s5 + $0x40] sm:$0xff]
    %v1030 = vld [vmem:[%s5 + $0x48] sm:$0xff]
    %v1031 = vld [vmem:[%s5 + $0x50] sm:$0xff]
    %v1032 = vld [vmem:[%s5 + $0x58] sm:$0xff]
    %v1033 = vld [vmem:[%s5 + $0x60] sm:$0xff]
    %v1034 = vld [vmem:[%s5 + $0x68] sm:$0xff]
    %v1035 = vld [vmem:[%s5 + $0x70] sm:$0xff]
    %v1036 = vld [vmem:[%s5 + $0x78] sm:$0xff]
    %v1037 = vld [vmem:[%s5 + $0x80] sm:$0xff]
    %v1038 = vld [vmem:[%s5 + $0x88] sm:$0xff]
    %v1039 = vld [vmem:[%s5 + $0x90] sm:$0xff]
    %v1040 = vld [vmem:[%s5 + $0x98] sm:$0xff]
    %v1041 = vld [vmem:[%s5 + $0xa0] sm:$0xff]
    %v1042 = vld [vmem:[%s5 + $0xa8] sm:$0xff]
    %v1043 = vld [vmem:[%s5 + $0xb0] sm:$0xff]
    %v1044 = vld [vmem:[%s5 + $0xb8] sm:$0xff]
    %v1045 = vld [vmem:[%s6] sm:$0xff]
    %v1046 = vld [vmem:[%s6 + $0x8] sm:$0xff]
    %v1047 = vld [vmem:[%s6 + $0x10] sm:$0xff]
    %v1048 = vld [vmem:[%s6 + $0x18] sm:$0xff]
    %v1049 = vld [vmem:[%s6 + $0x20] sm:$0xff]
    %v1050 = vld [vmem:[%s6 + $0x28] sm:$0xff]
    %v1051 = vld [vmem:[%s6 + $0x30] sm:$0xff]
    %v1052 = vld [vmem:[%s6 + $0x38] sm:$0xff]
    %1054 = vset.pattern.permute.xlu0 0
    %1055 = vperm.xlu0 %1054, %v1045
    %v1056 = vpop.permute.xlu0 %1055
    %1059 = vset.pattern.permute.xlu0 0
    %1060 = vperm.xlu0 %1059, %v1046
    %v1061 = vpop.permute.xlu0 %1060
    %1064 = vset.pattern.permute.xlu0 0
    %1065 = vperm.xlu0 %1064, %v1047
    %v1066 = vpop.permute.xlu0 %1065
    %1069 = vset.pattern.permute.xlu0 0
    %1070 = vperm.xlu0 %1069, %v1048
    %v1071 = vpop.permute.xlu0 %1070
    %1074 = vset.pattern.permute.xlu0 0
    %1075 = vperm.xlu0 %1074, %v1049
    %v1076 = vpop.permute.xlu0 %1075
    %1079 = vset.pattern.permute.xlu0 0
    %1080 = vperm.xlu0 %1079, %v1050
    %v1081 = vpop.permute.xlu0 %1080
    %1084 = vset.pattern.permute.xlu0 0
    %1085 = vperm.xlu0 %1084, %v1051
    %v1086 = vpop.permute.xlu0 %1085
    %1089 = vset.pattern.permute.xlu0 0
    %1090 = vperm.xlu0 %1089, %v1052
    %v1091 = vpop.permute.xlu0 %1090
    %vm1093 = vcmask 523264
    %v1095 = vsel %vm1093, %v1023, 0
    %v1098 = vsel %vm1093, %v1026, 0
    %v1101 = vsel %vm1093, %v1029, 0
    %v1104 = vsel %vm1093, %v1032, 0
    %v1107 = vsel %vm1093, %v1035, 0
    %v1110 = vsel %vm1093, %v1038, 0
    %v1113 = vsel %vm1093, %v1041, 0
    %v1116 = vsel %vm1093, %v1044, 0
    %1118 = vmatprep.subr.mxu0 0.0
    %1119 = vmatpush1.msra.mxu0 %v671
    %1120 = vmatprep.subr.mxu0 0.0
    %1121 = vmatpush1.msra.mxu0 %v666
    %1122 = vmatprep.subr.mxu0 0.0
    %1123 = vmatpush1.msra.mxu0 %v661
    %1124 = vmatprep.subr.mxu0 0.0
    %1125 = vmatpush1.msra.mxu0 %v656
    %1126 = vmatprep.subr.mxu0 0.0
    %1127 = vmatpush1.msra.mxu0 %v651
    %1128 = vmatprep.subr.mxu0 0.0
    %1129 = vmatpush1.msra.mxu0 %v646
    %1130 = vmatprep.subr.mxu0 0.0
    %1131 = vmatpush1.msra.mxu0 %v641
    %1132 = vmatprep.subr.mxu0 0.0
    %1133 = vmatpush1.msra.mxu0 %v636
    %1134 = vmatprep.subr.mxu0 0.0
    %1135 = vmatpush1.msra.mxu0 %v568
    %1136 = vmatprep.subr.mxu0 0.0
    %1137 = vmatpush1.msra.mxu0 %v567
    %1138 = vmatprep.subr.mxu0 0.0
    %1139 = vmatpush1.msra.mxu0 %v566
    %1140 = vmatprep.subr.mxu0 0.0
    %1141 = vmatpush1.msra.mxu0 %v565
    %1142 = vmatprep.subr.mxu0 0.0
    %1143 = vmatpush1.msra.mxu0 %v564
    %1144 = vmatprep.subr.mxu0 0.0
    %1145 = vmatpush1.msra.mxu0 %v563
    %1146 = vmatprep.subr.mxu0 0.0
    %1147 = vmatpush1.msra.mxu0 %v562
    %1148 = vmatprep.subr.mxu0 0.0
    %1149 = vmatpush1.msra.mxu0 %v561
    %1150 = vmatprep.subr.mxu0 0.0
    %1151 = vmatpush2.msra.mxu0 %v897
    %1152 = vmatprep.subr.mxu0 0.0
    %1153 = vmatpush2.msra.mxu0 %v892
    %1154 = vmatprep.subr.mxu0 0.0
    %1155 = vmatpush2.msra.mxu0 %v887
    %1156 = vmatprep.subr.mxu0 0.0
    %1157 = vmatpush2.msra.mxu0 %v882
    %1158 = vmatprep.subr.mxu0 0.0
    %1159 = vmatpush2.msra.mxu0 %v877
    %1160 = vmatprep.subr.mxu0 0.0
    %1161 = vmatpush2.msra.mxu0 %v872
    %1162 = vmatprep.subr.mxu0 0.0
    %1163 = vmatpush2.msra.mxu0 %v867
    %1164 = vmatprep.subr.mxu0 0.0
    %1165 = vmatpush2.msra.mxu0 %v862
    %1166 = vmatprep.subr.mxu0 0.0
    %1167 = vmatpush2.msra.mxu0 %v794
    %1168 = vmatprep.subr.mxu0 0.0
    %1169 = vmatpush2.msra.mxu0 %v793
    %1170 = vmatprep.subr.mxu0 0.0
    %1171 = vmatpush2.msra.mxu0 %v792
    %1172 = vmatprep.subr.mxu0 0.0
    %1173 = vmatpush2.msra.mxu0 %v791
    %1174 = vmatprep.subr.mxu0 0.0
    %1175 = vmatpush2.msra.mxu0 %v790
    %1176 = vmatprep.subr.mxu0 0.0
    %1177 = vmatpush2.msra.mxu0 %v789
    %1178 = vmatprep.subr.mxu0 0.0
    %1179 = vmatpush2.msra.mxu0 %v788
    %1180 = vmatprep.subr.mxu0 0.0
    %1181 = vmatpush2.msra.mxu0 %v787
    %1182 = vmatprep.mubr.f32.mxu0 %v1022
    %1183 = vmatmul.mubr.f32.gmra.mxu0 %v1021
    %v1184 = vpop.f32.mrf.mxu0
    %v1185 = vadd.f32 %v1056, %v1184
    %v1186 = vpop.f32.mrf.mxu0
    %1187 = vmatprep.mubr.f32.mxu0 %v1025
    %1188 = vmatmul.mubr.f32.gmra.mxu0 %v1024
    %v1189 = vpop.f32.mrf.mxu0
    %v1190 = vadd.f32 %v1061, %v1189
    %v1191 = vpop.f32.mrf.mxu0
    %1192 = vmatprep.mubr.f32.mxu0 %v1028
    %1193 = vmatmul.mubr.f32.gmra.mxu0 %v1027
    %v1194 = vpop.f32.mrf.mxu0
    %v1195 = vadd.f32 %v1066, %v1194
    %v1196 = vpop.f32.mrf.mxu0
    %1197 = vmatprep.mubr.f32.mxu0 %v1031
    %1198 = vmatmul.mubr.f32.gmra.mxu0 %v1030
    %v1199 = vpop.f32.mrf.mxu0
    %v1200 = vadd.f32 %v1071, %v1199
    %v1201 = vpop.f32.mrf.mxu0
    %1202 = vmatprep.mubr.f32.mxu0 %v1034
    %1203 = vmatmul.mubr.f32.gmra.mxu0 %v1033
    %v1204 = vpop.f32.mrf.mxu0
    %v1205 = vadd.f32 %v1076, %v1204
    %v1206 = vpop.f32.mrf.mxu0
    %1207 = vmatprep.mubr.f32.mxu0 %v1037
    %1208 = vmatmul.mubr.f32.gmra.mxu0 %v1036
    %v1209 = vpop.f32.mrf.mxu0
    %v1210 = vadd.f32 %v1081, %v1209
    %v1211 = vpop.f32.mrf.mxu0
    %1212 = vmatprep.mubr.f32.mxu0 %v1040
    %1213 = vmatmul.mubr.f32.gmra.mxu0 %v1039
    %v1214 = vpop.f32.mrf.mxu0
    %v1215 = vadd.f32 %v1086, %v1214
    %v1216 = vpop.f32.mrf.mxu0
    %1217 = vmatprep.mubr.f32.mxu0 %v1043
    %1218 = vmatmul.mubr.f32.gmra.mxu0 %v1042
    %v1219 = vpop.f32.mrf.mxu0
    %v1220 = vadd.f32 %v1091, %v1219
    %v1221 = vpop.f32.mrf.mxu0
    %1222 = vdwg.mxu0
    %1223 = vmatprep.subr.mxu0 0.0
    %1224 = vmatpush1.msra.mxu0 0.0
    %1225 = vmatprep.subr.mxu0 0.0
    %1226 = vmatpush1.msra.mxu0 0.0
    %1227 = vmatprep.subr.mxu0 0.0
    %1228 = vmatpush1.msra.mxu0 0.0
    %1229 = vmatprep.subr.mxu0 0.0
    %1230 = vmatpush1.msra.mxu0 0.0
    %1231 = vmatprep.subr.mxu0 0.0
    %1232 = vmatpush1.msra.mxu0 0.0
    %1233 = vmatprep.subr.mxu0 0.0
    %1234 = vmatpush1.msra.mxu0 0.0
    %1235 = vmatprep.subr.mxu0 0.0
    %1236 = vmatpush1.msra.mxu0 0.0
    %1237 = vmatprep.subr.mxu0 0.0
    %1238 = vmatpush1.msra.mxu0 0.0
    %1239 = vmatprep.subr.mxu0 0.0
    %1240 = vmatpush1.msra.mxu0 %v1020
    %1241 = vmatprep.subr.mxu0 0.0
    %1242 = vmatpush1.msra.mxu0 %v1019
    %1243 = vmatprep.subr.mxu0 0.0
    %1244 = vmatpush1.msra.mxu0 %v1018
    %1245 = vmatprep.subr.mxu0 0.0
    %1246 = vmatpush1.msra.mxu0 %v1017
    %1247 = vmatprep.subr.mxu0 0.0
    %1248 = vmatpush1.msra.mxu0 %v1016
    %1249 = vmatprep.subr.mxu0 0.0
    %1250 = vmatpush1.msra.mxu0 %v1015
    %1251 = vmatprep.subr.mxu0 0.0
    %1252 = vmatpush1.msra.mxu0 %v1014
    %1253 = vmatprep.subr.mxu0 0.0
    %1254 = vmatpush1.msra.mxu0 %v1013
    %1255 = vmatprep.subr.mxu0 0.0
    %1256 = vmatpush2.msra.mxu0 0.0
    %1257 = vmatprep.subr.mxu0 0.0
    %1258 = vmatpush2.msra.mxu0 0.0
    %1259 = vmatprep.subr.mxu0 0.0
    %1260 = vmatpush2.msra.mxu0 0.0
    %1261 = vmatprep.subr.mxu0 0.0
    %1262 = vmatpush2.msra.mxu0 0.0
    %1263 = vmatprep.subr.mxu0 0.0
    %1264 = vmatpush2.msra.mxu0 0.0
    %1265 = vmatprep.subr.mxu0 0.0
    %1266 = vmatpush2.msra.mxu0 0.0
    %1267 = vmatprep.subr.mxu0 0.0
    %1268 = vmatpush2.msra.mxu0 0.0
    %1269 = vmatprep.subr.mxu0 0.0
    %1270 = vmatpush2.msra.mxu0 0.0
    %1271 = vmatprep.subr.mxu0 0.0
    %1272 = vmatpush2.msra.mxu0 0.0
    %1273 = vmatprep.subr.mxu0 0.0
    %1274 = vmatpush2.msra.mxu0 0.0
    %1275 = vmatprep.subr.mxu0 0.0
    %1276 = vmatpush2.msra.mxu0 0.0
    %1277 = vmatprep.subr.mxu0 0.0
    %1278 = vmatpush2.msra.mxu0 0.0
    %1279 = vmatprep.subr.mxu0 0.0
    %1280 = vmatpush2.msra.mxu0 0.0
    %1281 = vmatprep.subr.mxu0 0.0
    %1282 = vmatpush2.msra.mxu0 0.0
    %1283 = vmatprep.subr.mxu0 0.0
    %1284 = vmatpush2.msra.mxu0 0.0
    %1285 = vmatprep.subr.mxu0 0.0
    %1286 = vmatpush2.msra.mxu0 0.0
    %1287 = vmatprep.mubr.f32.mxu0 0.0
    %1288 = vmatmul.mubr.f32.gmra.mxu0 %v1095
    %v1289 = vpop.f32.mrf.mxu0
    %v1290 = vadd.f32 %v1185, %v1289
    %v1291 = vpop.f32.mrf.mxu0
    %1292 = vmatprep.mubr.f32.mxu0 0.0
    %1293 = vmatmul.mubr.f32.gmra.mxu0 %v1098
    %v1294 = vpop.f32.mrf.mxu0
    %v1295 = vadd.f32 %v1190, %v1294
    %v1296 = vpop.f32.mrf.mxu0
    %1297 = vmatprep.mubr.f32.mxu0 0.0
    %1298 = vmatmul.mubr.f32.gmra.mxu0 %v1101
    %v1299 = vpop.f32.mrf.mxu0
    %v1300 = vadd.f32 %v1195, %v1299
    %v1301 = vpop.f32.mrf.mxu0
    %1302 = vmatprep.mubr.f32.mxu0 0.0
    %1303 = vmatmul.mubr.f32.gmra.mxu0 %v1104
    %v1304 = vpop.f32.mrf.mxu0
    %v1305 = vadd.f32 %v1200, %v1304
    %v1306 = vpop.f32.mrf.mxu0
    %1307 = vmatprep.mubr.f32.mxu0 0.0
    %1308 = vmatmul.mubr.f32.gmra.mxu0 %v1107
    %v1309 = vpop.f32.mrf.mxu0
    %v1310 = vadd.f32 %v1205, %v1309
    %v1311 = vpop.f32.mrf.mxu0
    %1312 = vmatprep.mubr.f32.mxu0 0.0
    %1313 = vmatmul.mubr.f32.gmra.mxu0 %v1110
    %v1314 = vpop.f32.mrf.mxu0
    %v1315 = vadd.f32 %v1210, %v1314
    %v1316 = vpop.f32.mrf.mxu0
    %1317 = vmatprep.mubr.f32.mxu0 0.0
    %1318 = vmatmul.mubr.f32.gmra.mxu0 %v1113
    %v1319 = vpop.f32.mrf.mxu0
    %v1320 = vadd.f32 %v1215, %v1319
    %v1321 = vpop.f32.mrf.mxu0
    %1322 = vmatprep.mubr.f32.mxu0 0.0
    %1323 = vmatmul.mubr.f32.gmra.mxu0 %v1116
    %v1324 = vpop.f32.mrf.mxu0
    %v1325 = vadd.f32 %v1220, %v1324
    %v1326 = vpop.f32.mrf.mxu0
    %1327 = vdwg.mxu0
    %v1328 = vmax.f32 %v1290, 0.0
    %v1329 = vmax.f32 %v1295, 0.0
    %v1330 = vmax.f32 %v1300, 0.0
    %v1331 = vmax.f32 %v1305, 0.0
    %v1332 = vmax.f32 %v1310, 0.0
    %v1333 = vmax.f32 %v1315, 0.0
    %v1334 = vmax.f32 %v1320, 0.0
    %v1335 = vmax.f32 %v1325, 0.0
    %v1336 = vadd.f32 %v1328, %v561
    %v1337 = vadd.f32 %v1329, %v562
    %v1338 = vadd.f32 %v1330, %v563
    %v1339 = vadd.f32 %v1331, %v564
    %v1340 = vadd.f32 %v1332, %v565
    %v1341 = vadd.f32 %v1333, %v566
    %v1342 = vadd.f32 %v1334, %v567
    %v1343 = vadd.f32 %v1335, %v568
    %1344 = vmatprep.subr.mxu0 0.0
    %1345 = vmatpush1.msra.mxu0 %v48
    %1346 = vmatprep.subr.mxu0 0.0
    %1347 = vmatpush1.msra.mxu0 %v47
    %1348 = vmatprep.subr.mxu0 0.0
    %1349 = vmatpush1.msra.mxu0 %v46
    %1350 = vmatprep.subr.mxu0 0.0
    %1351 = vmatpush1.msra.mxu0 %v45
    %1352 = vmatprep.subr.mxu0 0.0
    %1353 = vmatpush1.msra.mxu0 %v44
    %1354 = vmatprep.subr.mxu0 0.0
    %1355 = vmatpush1.msra.mxu0 %v43
    %1356 = vmatprep.subr.mxu0 0.0
    %1357 = vmatpush1.msra.mxu0 %v42
    %1358 = vmatprep.subr.mxu0 0.0
    %1359 = vmatpush1.msra.mxu0 %v41
    %1360 = vmatprep.subr.mxu0 0.0
    %1361 = vmatpush1.msra.mxu0 %v40
    %1362 = vmatprep.subr.mxu0 0.0
    %1363 = vmatpush1.msra.mxu0 %v39
    %1364 = vmatprep.subr.mxu0 0.0
    %1365 = vmatpush1.msra.mxu0 %v38
    %1366 = vmatprep.subr.mxu0 0.0
    %1367 = vmatpush1.msra.mxu0 %v37
    %1368 = vmatprep.subr.mxu0 0.0
    %1369 = vmatpush1.msra.mxu0 %v36
    %1370 = vmatprep.subr.mxu0 0.0
    %1371 = vmatpush1.msra.mxu0 %v35
    %1372 = vmatprep.subr.mxu0 0.0
    %1373 = vmatpush1.msra.mxu0 %v34
    %1374 = vmatprep.subr.mxu0 0.0
    %1375 = vmatpush1.msra.mxu0 %v33
    %1376 = vmatprep.subr.mxu0 0.0
    %1377 = vmatpush2.msra.mxu0 0.0
    %1378 = vmatprep.subr.mxu0 0.0
    %1379 = vmatpush2.msra.mxu0 0.0
    %1380 = vmatprep.subr.mxu0 0.0
    %1381 = vmatpush2.msra.mxu0 0.0
    %1382 = vmatprep.subr.mxu0 0.0
    %1383 = vmatpush2.msra.mxu0 0.0
    %1384 = vmatprep.subr.mxu0 0.0
    %1385 = vmatpush2.msra.mxu0 0.0
    %1386 = vmatprep.subr.mxu0 0.0
    %1387 = vmatpush2.msra.mxu0 0.0
    %1388 = vmatprep.subr.mxu0 0.0
    %1389 = vmatpush2.msra.mxu0 0.0
    %1390 = vmatprep.subr.mxu0 0.0
    %1391 = vmatpush2.msra.mxu0 0.0
    %1392 = vmatprep.subr.mxu0 0.0
    %1393 = vmatpush2.msra.mxu0 0.0
    %1394 = vmatprep.subr.mxu0 0.0
    %1395 = vmatpush2.msra.mxu0 0.0
    %1396 = vmatprep.subr.mxu0 0.0
    %1397 = vmatpush2.msra.mxu0 0.0
    %1398 = vmatprep.subr.mxu0 0.0
    %1399 = vmatpush2.msra.mxu0 0.0
    %1400 = vmatprep.subr.mxu0 0.0
    %1401 = vmatpush2.msra.mxu0 0.0
    %1402 = vmatprep.subr.mxu0 0.0
    %1403 = vmatpush2.msra.mxu0 0.0
    %1404 = vmatprep.subr.mxu0 0.0
    %1405 = vmatpush2.msra.mxu0 0.0
    %1406 = vmatprep.subr.mxu0 0.0
    %1407 = vmatpush2.msra.mxu0 0.0
    %1408 = vmatprep.mubr.f32.mxu0 0.0
    %1409 = vmatmul.mubr.f32.gmra.mxu0 %v1336
    %v1410 = vpop.f32.mrf.mxu0
    %v1411 = vadd.f32 0.0, %v1410
    %v1412 = vpop.f32.mrf.mxu0
    %1413 = vmatprep.mubr.f32.mxu0 0.0
    %1414 = vmatmul.mubr.f32.gmra.mxu0 %v1337
    %v1415 = vpop.f32.mrf.mxu0
    %v1416 = vadd.f32 0.0, %v1415
    %v1417 = vpop.f32.mrf.mxu0
    %1418 = vmatprep.mubr.f32.mxu0 0.0
    %1419 = vmatmul.mubr.f32.gmra.mxu0 %v1338
    %v1420 = vpop.f32.mrf.mxu0
    %v1421 = vadd.f32 0.0, %v1420
    %v1422 = vpop.f32.mrf.mxu0
    %1423 = vmatprep.mubr.f32.mxu0 0.0
    %1424 = vmatmul.mubr.f32.gmra.mxu0 %v1339
    %v1425 = vpop.f32.mrf.mxu0
    %v1426 = vadd.f32 0.0, %v1425
    %v1427 = vpop.f32.mrf.mxu0
    %1428 = vmatprep.mubr.f32.mxu0 0.0
    %1429 = vmatmul.mubr.f32.gmra.mxu0 %v1340
    %v1430 = vpop.f32.mrf.mxu0
    %v1431 = vadd.f32 0.0, %v1430
    %v1432 = vpop.f32.mrf.mxu0
    %1433 = vmatprep.mubr.f32.mxu0 0.0
    %1434 = vmatmul.mubr.f32.gmra.mxu0 %v1341
    %v1435 = vpop.f32.mrf.mxu0
    %v1436 = vadd.f32 0.0, %v1435
    %v1437 = vpop.f32.mrf.mxu0
    %1438 = vmatprep.mubr.f32.mxu0 0.0
    %1439 = vmatmul.mubr.f32.gmra.mxu0 %v1342
    %v1440 = vpop.f32.mrf.mxu0
    %v1441 = vadd.f32 0.0, %v1440
    %v1442 = vpop.f32.mrf.mxu0
    %1443 = vmatprep.mubr.f32.mxu0 0.0
    %1444 = vmatmul.mubr.f32.gmra.mxu0 %v1343
    %v1445 = vpop.f32.mrf.mxu0
    %v1446 = vadd.f32 0.0, %v1445
    %v1447 = vpop.f32.mrf.mxu0
    %1448 = vdwg.mxu0
    %1449 = vmatprep.subr.mxu0 0.0
    %1450 = vmatpush1.msra.mxu0 %v48
    %1451 = vmatprep.subr.mxu0 0.0
    %1452 = vmatpush1.msra.mxu0 %v47
    %1453 = vmatprep.subr.mxu0 0.0
    %1454 = vmatpush1.msra.mxu0 %v46
    %1455 = vmatprep.subr.mxu0 0.0
    %1456 = vmatpush1.msra.mxu0 %v45
    %1457 = vmatprep.subr.mxu0 0.0
    %1458 = vmatpush1.msra.mxu0 %v44
    %1459 = vmatprep.subr.mxu0 0.0
    %1460 = vmatpush1.msra.mxu0 %v43
    %1461 = vmatprep.subr.mxu0 0.0
    %1462 = vmatpush1.msra.mxu0 %v42
    %1463 = vmatprep.subr.mxu0 0.0
    %1464 = vmatpush1.msra.mxu0 %v41
    %1465 = vmatprep.subr.mxu0 0.0
    %1466 = vmatpush1.msra.mxu0 %v40
    %1467 = vmatprep.subr.mxu0 0.0
    %1468 = vmatpush1.msra.mxu0 %v39
    %1469 = vmatprep.subr.mxu0 0.0
    %1470 = vmatpush1.msra.mxu0 %v38
    %1471 = vmatprep.subr.mxu0 0.0
    %1472 = vmatpush1.msra.mxu0 %v37
    %1473 = vmatprep.subr.mxu0 0.0
    %1474 = vmatpush1.msra.mxu0 %v36
    %1475 = vmatprep.subr.mxu0 0.0
    %1476 = vmatpush1.msra.mxu0 %v35
    %1477 = vmatprep.subr.mxu0 0.0
    %1478 = vmatpush1.msra.mxu0 %v34
    %1479 = vmatprep.subr.mxu0 0.0
    %1480 = vmatpush1.msra.mxu0 %v33
    %1481 = vmatprep.subr.mxu0 0.0
    %1482 = vmatpush2.msra.mxu0 0.0
    %1483 = vmatprep.subr.mxu0 0.0
    %1484 = vmatpush2.msra.mxu0 0.0
    %1485 = vmatprep.subr.mxu0 0.0
    %1486 = vmatpush2.msra.mxu0 0.0
    %1487 = vmatprep.subr.mxu0 0.0
    %1488 = vmatpush2.msra.mxu0 0.0
    %1489 = vmatprep.subr.mxu0 0.0
    %1490 = vmatpush2.msra.mxu0 0.0
    %1491 = vmatprep.subr.mxu0 0.0
    %1492 = vmatpush2.msra.mxu0 0.0
    %1493 = vmatprep.subr.mxu0 0.0
    %1494 = vmatpush2.msra.mxu0 0.0
    %1495 = vmatprep.subr.mxu0 0.0
    %1496 = vmatpush2.msra.mxu0 0.0
    %1497 = vmatprep.subr.mxu0 0.0
    %1498 = vmatpush2.msra.mxu0 0.0
    %1499 = vmatprep.subr.mxu0 0.0
    %1500 = vmatpush2.msra.mxu0 0.0
    %1501 = vmatprep.subr.mxu0 0.0
    %1502 = vmatpush2.msra.mxu0 0.0
    %1503 = vmatprep.subr.mxu0 0.0
    %1504 = vmatpush2.msra.mxu0 0.0
    %1505 = vmatprep.subr.mxu0 0.0
    %1506 = vmatpush2.msra.mxu0 0.0
    %1507 = vmatprep.subr.mxu0 0.0
    %1508 = vmatpush2.msra.mxu0 0.0
    %1509 = vmatprep.subr.mxu0 0.0
    %1510 = vmatpush2.msra.mxu0 0.0
    %1511 = vmatprep.subr.mxu0 0.0
    %1512 = vmatpush2.msra.mxu0 0.0
    %1513 = vmatprep.mubr.f32.mxu0 0.0
    %1514 = vmatmul.mubr.f32.gmra.mxu0 %v1411
    %v1515 = vpop.f32.mrf.mxu0
    %v1516 = vadd.f32 0.0, %v1515
    %v1517 = vpop.f32.mrf.mxu0
    %1518 = vmatprep.mubr.f32.mxu0 0.0
    %1519 = vmatmul.mubr.f32.gmra.mxu0 %v1416
    %v1520 = vpop.f32.mrf.mxu0
    %v1521 = vadd.f32 0.0, %v1520
    %v1522 = vpop.f32.mrf.mxu0
    %1523 = vmatprep.mubr.f32.mxu0 0.0
    %1524 = vmatmul.mubr.f32.gmra.mxu0 %v1421
    %v1525 = vpop.f32.mrf.mxu0
    %v1526 = vadd.f32 0.0, %v1525
    %v1527 = vpop.f32.mrf.mxu0
    %1528 = vmatprep.mubr.f32.mxu0 0.0
    %1529 = vmatmul.mubr.f32.gmra.mxu0 %v1426
    %v1530 = vpop.f32.mrf.mxu0
    %v1531 = vadd.f32 0.0, %v1530
    %v1532 = vpop.f32.mrf.mxu0
    %1533 = vmatprep.mubr.f32.mxu0 0.0
    %1534 = vmatmul.mubr.f32.gmra.mxu0 %v1431
    %v1535 = vpop.f32.mrf.mxu0
    %v1536 = vadd.f32 0.0, %v1535
    %v1537 = vpop.f32.mrf.mxu0
    %1538 = vmatprep.mubr.f32.mxu0 0.0
    %1539 = vmatmul.mubr.f32.gmra.mxu0 %v1436
    %v1540 = vpop.f32.mrf.mxu0
    %v1541 = vadd.f32 0.0, %v1540
    %v1542 = vpop.f32.mrf.mxu0
    %1543 = vmatprep.mubr.f32.mxu0 0.0
    %1544 = vmatmul.mubr.f32.gmra.mxu0 %v1441
    %v1545 = vpop.f32.mrf.mxu0
    %v1546 = vadd.f32 0.0, %v1545
    %v1547 = vpop.f32.mrf.mxu0
    %1548 = vmatprep.mubr.f32.mxu0 0.0
    %1549 = vmatmul.mubr.f32.gmra.mxu0 %v1446
    %v1550 = vpop.f32.mrf.mxu0
    %v1551 = vadd.f32 0.0, %v1550
    %v1552 = vpop.f32.mrf.mxu0
    %1553 = vdwg.mxu0
    %v1554 = vmul.f32 %v1516, 2.0
    %v1555 = vmul.f32 %v1521, 2.0
    %v1556 = vmul.f32 %v1526, 2.0
    %v1557 = vmul.f32 %v1531, 2.0
    %v1558 = vmul.f32 %v1536, 2.0
    %v1559 = vmul.f32 %v1541, 2.0
    %v1560 = vmul.f32 %v1546, 2.0
    %v1561 = vmul.f32 %v1551, 2.0
    %v1562 = vsub.f32 %v1554, %v1336
    %v1563 = vsub.f32 %v1555, %v1337
    %v1564 = vsub.f32 %v1556, %v1338
    %v1565 = vsub.f32 %v1557, %v1339
    %v1566 = vsub.f32 %v1558, %v1340
    %v1567 = vsub.f32 %v1559, %v1341
    %v1568 = vsub.f32 %v1560, %v1342
    %v1569 = vsub.f32 %v1561, %v1343
    %1570 = vmatprep.subr.mxu0 0.0
    %1571 = vmatpush1.msra.mxu0 %v64
    %1572 = vmatprep.subr.mxu0 0.0
    %1573 = vmatpush1.msra.mxu0 %v63
    %1574 = vmatprep.subr.mxu0 0.0
    %1575 = vmatpush1.msra.mxu0 %v62
    %1576 = vmatprep.subr.mxu0 0.0
    %1577 = vmatpush1.msra.mxu0 %v61
    %1578 = vmatprep.subr.mxu0 0.0
    %1579 = vmatpush1.msra.mxu0 %v60
    %1580 = vmatprep.subr.mxu0 0.0
    %1581 = vmatpush1.msra.mxu0 %v59
    %1582 = vmatprep.subr.mxu0 0.0
    %1583 = vmatpush1.msra.mxu0 %v58
    %1584 = vmatprep.subr.mxu0 0.0
    %1585 = vmatpush1.msra.mxu0 %v57
    %1586 = vmatprep.subr.mxu0 0.0
    %1587 = vmatpush1.msra.mxu0 %v56
    %1588 = vmatprep.subr.mxu0 0.0
    %1589 = vmatpush1.msra.mxu0 %v55
    %1590 = vmatprep.subr.mxu0 0.0
    %1591 = vmatpush1.msra.mxu0 %v54
    %1592 = vmatprep.subr.mxu0 0.0
    %1593 = vmatpush1.msra.mxu0 %v53
    %1594 = vmatprep.subr.mxu0 0.0
    %1595 = vmatpush1.msra.mxu0 %v52
    %1596 = vmatprep.subr.mxu0 0.0
    %1597 = vmatpush1.msra.mxu0 %v51
    %1598 = vmatprep.subr.mxu0 0.0
    %1599 = vmatpush1.msra.mxu0 %v50
    %1600 = vmatprep.subr.mxu0 0.0
    %1601 = vmatpush1.msra.mxu0 %v49
    %1602 = vmatprep.subr.mxu0 0.0
    %1603 = vmatpush2.msra.mxu0 0.0
    %1604 = vmatprep.subr.mxu0 0.0
    %1605 = vmatpush2.msra.mxu0 0.0
    %1606 = vmatprep.subr.mxu0 0.0
    %1607 = vmatpush2.msra.mxu0 0.0
    %1608 = vmatprep.subr.mxu0 0.0
    %1609 = vmatpush2.msra.mxu0 0.0
    %1610 = vmatprep.subr.mxu0 0.0
    %1611 = vmatpush2.msra.mxu0 0.0
    %1612 = vmatprep.subr.mxu0 0.0
    %1613 = vmatpush2.msra.mxu0 0.0
    %1614 = vmatprep.subr.mxu0 0.0
    %1615 = vmatpush2.msra.mxu0 0.0
    %1616 = vmatprep.subr.mxu0 0.0
    %1617 = vmatpush2.msra.mxu0 0.0
    %1618 = vmatprep.subr.mxu0 0.0
    %1619 = vmatpush2.msra.mxu0 0.0
    %1620 = vmatprep.subr.mxu0 0.0
    %1621 = vmatpush2.msra.mxu0 0.0
    %1622 = vmatprep.subr.mxu0 0.0
    %1623 = vmatpush2.msra.mxu0 0.0
    %1624 = vmatprep.subr.mxu0 0.0
    %1625 = vmatpush2.msra.mxu0 0.0
    %1626 = vmatprep.subr.mxu0 0.0
    %1627 = vmatpush2.msra.mxu0 0.0
    %1628 = vmatprep.subr.mxu0 0.0
    %1629 = vmatpush2.msra.mxu0 0.0
    %1630 = vmatprep.subr.mxu0 0.0
    %1631 = vmatpush2.msra.mxu0 0.0
    %1632 = vmatprep.subr.mxu0 0.0
    %1633 = vmatpush2.msra.mxu0 0.0
    %1634 = vmatprep.mubr.f32.mxu0 0.0
    %1635 = vmatmul.mubr.f32.gmra.mxu0 %v1411
    %v1636 = vpop.f32.mrf.mxu0
    %v1637 = vadd.f32 0.0, %v1636
    %v1638 = vpop.f32.mrf.mxu0
    %1639 = vmatprep.mubr.f32.mxu0 0.0
    %1640 = vmatmul.mubr.f32.gmra.mxu0 %v1416
    %v1641 = vpop.f32.mrf.mxu0
    %v1642 = vadd.f32 0.0, %v1641
    %v1643 = vpop.f32.mrf.mxu0
    %1644 = vmatprep.mubr.f32.mxu0 0.0
    %1645 = vmatmul.mubr.f32.gmra.mxu0 %v1421
    %v1646 = vpop.f32.mrf.mxu0
    %v1647 = vadd.f32 0.0, %v1646
    %v1648 = vpop.f32.mrf.mxu0
    %1649 = vmatprep.mubr.f32.mxu0 0.0
    %1650 = vmatmul.mubr.f32.gmra.mxu0 %v1426
    %v1651 = vpop.f32.mrf.mxu0
    %v1652 = vadd.f32 0.0, %v1651
    %v1653 = vpop.f32.mrf.mxu0
    %1654 = vmatprep.mubr.f32.mxu0 0.0
    %1655 = vmatmul.mubr.f32.gmra.mxu0 %v1431
    %v1656 = vpop.f32.mrf.mxu0
    %v1657 = vadd.f32 0.0, %v1656
    %v1658 = vpop.f32.mrf.mxu0
    %1659 = vmatprep.mubr.f32.mxu0 0.0
    %1660 = vmatmul.mubr.f32.gmra.mxu0 %v1436
    %v1661 = vpop.f32.mrf.mxu0
    %v1662 = vadd.f32 0.0, %v1661
    %v1663 = vpop.f32.mrf.mxu0
    %1664 = vmatprep.mubr.f32.mxu0 0.0
    %1665 = vmatmul.mubr.f32.gmra.mxu0 %v1441
    %v1666 = vpop.f32.mrf.mxu0
    %v1667 = vadd.f32 0.0, %v1666
    %v1668 = vpop.f32.mrf.mxu0
    %1669 = vmatprep.mubr.f32.mxu0 0.0
    %1670 = vmatmul.mubr.f32.gmra.mxu0 %v1446
    %v1671 = vpop.f32.mrf.mxu0
    %v1672 = vadd.f32 0.0, %v1671
    %v1673 = vpop.f32.mrf.mxu0
    %1674 = vdwg.mxu0
    %1675 = vmatprep.subr.mxu0 0.0
    %1676 = vmatpush1.msra.mxu0 %v64
    %1677 = vmatprep.subr.mxu0 0.0
    %1678 = vmatpush1.msra.mxu0 %v63
    %1679 = vmatprep.subr.mxu0 0.0
    %1680 = vmatpush1.msra.mxu0 %v62
    %1681 = vmatprep.subr.mxu0 0.0
    %1682 = vmatpush1.msra.mxu0 %v61
    %1683 = vmatprep.subr.mxu0 0.0
    %1684 = vmatpush1.msra.mxu0 %v60
    %1685 = vmatprep.subr.mxu0 0.0
    %1686 = vmatpush1.msra.mxu0 %v59
    %1687 = vmatprep.subr.mxu0 0.0
    %1688 = vmatpush1.msra.mxu0 %v58
    %1689 = vmatprep.subr.mxu0 0.0
    %1690 = vmatpush1.msra.mxu0 %v57
    %1691 = vmatprep.subr.mxu0 0.0
    %1692 = vmatpush1.msra.mxu0 %v56
    %1693 = vmatprep.subr.mxu0 0.0
    %1694 = vmatpush1.msra.mxu0 %v55
    %1695 = vmatprep.subr.mxu0 0.0
    %1696 = vmatpush1.msra.mxu0 %v54
    %1697 = vmatprep.subr.mxu0 0.0
    %1698 = vmatpush1.msra.mxu0 %v53
    %1699 = vmatprep.subr.mxu0 0.0
    %1700 = vmatpush1.msra.mxu0 %v52
    %1701 = vmatprep.subr.mxu0 0.0
    %1702 = vmatpush1.msra.mxu0 %v51
    %1703 = vmatprep.subr.mxu0 0.0
    %1704 = vmatpush1.msra.mxu0 %v50
    %1705 = vmatprep.subr.mxu0 0.0
    %1706 = vmatpush1.msra.mxu0 %v49
    %1707 = vmatprep.subr.mxu0 0.0
    %1708 = vmatpush2.msra.mxu0 0.0
    %1709 = vmatprep.subr.mxu0 0.0
    %1710 = vmatpush2.msra.mxu0 0.0
    %1711 = vmatprep.subr.mxu0 0.0
    %1712 = vmatpush2.msra.mxu0 0.0
    %1713 = vmatprep.subr.mxu0 0.0
    %1714 = vmatpush2.msra.mxu0 0.0
    %1715 = vmatprep.subr.mxu0 0.0
    %1716 = vmatpush2.msra.mxu0 0.0
    %1717 = vmatprep.subr.mxu0 0.0
    %1718 = vmatpush2.msra.mxu0 0.0
    %1719 = vmatprep.subr.mxu0 0.0
    %1720 = vmatpush2.msra.mxu0 0.0
    %1721 = vmatprep.subr.mxu0 0.0
    %1722 = vmatpush2.msra.mxu0 0.0
    %1723 = vmatprep.subr.mxu0 0.0
    %1724 = vmatpush2.msra.mxu0 0.0
    %1725 = vmatprep.subr.mxu0 0.0
    %1726 = vmatpush2.msra.mxu0 0.0
    %1727 = vmatprep.subr.mxu0 0.0
    %1728 = vmatpush2.msra.mxu0 0.0
    %1729 = vmatprep.subr.mxu0 0.0
    %1730 = vmatpush2.msra.mxu0 0.0
    %1731 = vmatprep.subr.mxu0 0.0
    %1732 = vmatpush2.msra.mxu0 0.0
    %1733 = vmatprep.subr.mxu0 0.0
    %1734 = vmatpush2.msra.mxu0 0.0
    %1735 = vmatprep.subr.mxu0 0.0
    %1736 = vmatpush2.msra.mxu0 0.0
    %1737 = vmatprep.subr.mxu0 0.0
    %1738 = vmatpush2.msra.mxu0 0.0
    %1739 = vmatprep.mubr.f32.mxu0 0.0
    %1740 = vmatmul.mubr.f32.gmra.mxu0 %v1637
    %v1741 = vpop.f32.mrf.mxu0
    %v1742 = vadd.f32 0.0, %v1741
    %v1743 = vpop.f32.mrf.mxu0
    %1744 = vmatprep.mubr.f32.mxu0 0.0
    %1745 = vmatmul.mubr.f32.gmra.mxu0 %v1642
    %v1746 = vpop.f32.mrf.mxu0
    %v1747 = vadd.f32 0.0, %v1746
    %v1748 = vpop.f32.mrf.mxu0
    %1749 = vmatprep.mubr.f32.mxu0 0.0
    %1750 = vmatmul.mubr.f32.gmra.mxu0 %v1647
    %v1751 = vpop.f32.mrf.mxu0
    %v1752 = vadd.f32 0.0, %v1751
    %v1753 = vpop.f32.mrf.mxu0
    %1754 = vmatprep.mubr.f32.mxu0 0.0
    %1755 = vmatmul.mubr.f32.gmra.mxu0 %v1652
    %v1756 = vpop.f32.mrf.mxu0
    %v1757 = vadd.f32 0.0, %v1756
    %v1758 = vpop.f32.mrf.mxu0
    %1759 = vmatprep.mubr.f32.mxu0 0.0
    %1760 = vmatmul.mubr.f32.gmra.mxu0 %v1657
    %v1761 = vpop.f32.mrf.mxu0
    %v1762 = vadd.f32 0.0, %v1761
    %v1763 = vpop.f32.mrf.mxu0
    %1764 = vmatprep.mubr.f32.mxu0 0.0
    %1765 = vmatmul.mubr.f32.gmra.mxu0 %v1662
    %v1766 = vpop.f32.mrf.mxu0
    %v1767 = vadd.f32 0.0, %v1766
    %v1768 = vpop.f32.mrf.mxu0
    %1769 = vmatprep.mubr.f32.mxu0 0.0
    %1770 = vmatmul.mubr.f32.gmra.mxu0 %v1667
    %v1771 = vpop.f32.mrf.mxu0
    %v1772 = vadd.f32 0.0, %v1771
    %v1773 = vpop.f32.mrf.mxu0
    %1774 = vmatprep.mubr.f32.mxu0 0.0
    %1775 = vmatmul.mubr.f32.gmra.mxu0 %v1672
    %v1776 = vpop.f32.mrf.mxu0
    %v1777 = vadd.f32 0.0, %v1776
    %v1778 = vpop.f32.mrf.mxu0
    %1779 = vdwg.mxu0
    %v1780 = vmul.f32 %v1742, 2.0
    %v1781 = vmul.f32 %v1747, 2.0
    %v1782 = vmul.f32 %v1752, 2.0
    %v1783 = vmul.f32 %v1757, 2.0
    %v1784 = vmul.f32 %v1762, 2.0
    %v1785 = vmul.f32 %v1767, 2.0
    %v1786 = vmul.f32 %v1772, 2.0
    %v1787 = vmul.f32 %v1777, 2.0
    %v1788 = vsub.f32 %v1780, %v1411
    %v1789 = vsub.f32 %v1781, %v1416
    %v1790 = vsub.f32 %v1782, %v1421
    %v1791 = vsub.f32 %v1783, %v1426
    %v1792 = vsub.f32 %v1784, %v1431
    %v1793 = vsub.f32 %v1785, %v1436
    %v1794 = vsub.f32 %v1786, %v1441
    %v1795 = vsub.f32 %v1787, %v1446
    %v1796 = vld [vmem:[%s7] sm:$0xff]
    %v1797 = vld [vmem:[%s7 + $0x8] sm:$0xff]
    %v1798 = vld [vmem:[%s7 + $0x10] sm:$0xff]
    %v1799 = vld [vmem:[%s7 + $0x18] sm:$0xff]
    %v1800 = vld [vmem:[%s7 + $0x20] sm:$0xff]
    %v1801 = vld [vmem:[%s7 + $0x28] sm:$0xff]
    %v1802 = vld [vmem:[%s8] sm:$0xff]
    %v1803 = vld [vmem:[%s8 + $0x8] sm:$0xff]
    %1805 = vset.pattern.permute.xlu0 0
    %1806 = vperm.xlu0 %1805, %v1802
    %v1807 = vpop.permute.xlu0 %1806
    %1810 = vset.pattern.permute.xlu0 0
    %1811 = vperm.xlu0 %1810, %v1803
    %v1812 = vpop.permute.xlu0 %1811
    %v1815 = vsel %vm1093, %v1798, 0
    %v1818 = vsel %vm1093, %v1801, 0
    %1820 = vmatprep.subr.mxu0 0.0
    %1821 = vmatpush1.msra.mxu0 %v1446
    %1822 = vmatprep.subr.mxu0 0.0
    %1823 = vmatpush1.msra.mxu0 %v1441
    %1824 = vmatprep.subr.mxu0 0.0
    %1825 = vmatpush1.msra.mxu0 %v1436
    %1826 = vmatprep.subr.mxu0 0.0
    %1827 = vmatpush1.msra.mxu0 %v1431
    %1828 = vmatprep.subr.mxu0 0.0
    %1829 = vmatpush1.msra.mxu0 %v1426
    %1830 = vmatprep.subr.mxu0 0.0
    %1831 = vmatpush1.msra.mxu0 %v1421
    %1832 = vmatprep.subr.mxu0 0.0
    %1833 = vmatpush1.msra.mxu0 %v1416
    %1834 = vmatprep.subr.mxu0 0.0
    %1835 = vmatpush1.msra.mxu0 %v1411
    %1836 = vmatprep.subr.mxu0 0.0
    %1837 = vmatpush1.msra.mxu0 %v1343
    %1838 = vmatprep.subr.mxu0 0.0
    %1839 = vmatpush1.msra.mxu0 %v1342
    %1840 = vmatprep.subr.mxu0 0.0
    %1841 = vmatpush1.msra.mxu0 %v1341
    %1842 = vmatprep.subr.mxu0 0.0
    %1843 = vmatpush1.msra.mxu0 %v1340
    %1844 = vmatprep.subr.mxu0 0.0
    %1845 = vmatpush1.msra.mxu0 %v1339
    %1846 = vmatprep.subr.mxu0 0.0
    %1847 = vmatpush1.msra.mxu0 %v1338
    %1848 = vmatprep.subr.mxu0 0.0
    %1849 = vmatpush1.msra.mxu0 %v1337
    %1850 = vmatprep.subr.mxu0 0.0
    %1851 = vmatpush1.msra.mxu0 %v1336
    %1852 = vmatprep.subr.mxu0 0.0
    %1853 = vmatpush2.msra.mxu0 %v1672
    %1854 = vmatprep.subr.mxu0 0.0
    %1855 = vmatpush2.msra.mxu0 %v1667
    %1856 = vmatprep.subr.mxu0 0.0
    %1857 = vmatpush2.msra.mxu0 %v1662
    %1858 = vmatprep.subr.mxu0 0.0
    %1859 = vmatpush2.msra.mxu0 %v1657
    %1860 = vmatprep.subr.mxu0 0.0
    %1861 = vmatpush2.msra.mxu0 %v1652
    %1862 = vmatprep.subr.mxu0 0.0
    %1863 = vmatpush2.msra.mxu0 %v1647
    %1864 = vmatprep.subr.mxu0 0.0
    %1865 = vmatpush2.msra.mxu0 %v1642
    %1866 = vmatprep.subr.mxu0 0.0
    %1867 = vmatpush2.msra.mxu0 %v1637
    %1868 = vmatprep.subr.mxu0 0.0
    %1869 = vmatpush2.msra.mxu0 %v1569
    %1870 = vmatprep.subr.mxu0 0.0
    %1871 = vmatpush2.msra.mxu0 %v1568
    %1872 = vmatprep.subr.mxu0 0.0
    %1873 = vmatpush2.msra.mxu0 %v1567
    %1874 = vmatprep.subr.mxu0 0.0
    %1875 = vmatpush2.msra.mxu0 %v1566
    %1876 = vmatprep.subr.mxu0 0.0
    %1877 = vmatpush2.msra.mxu0 %v1565
    %1878 = vmatprep.subr.mxu0 0.0
    %1879 = vmatpush2.msra.mxu0 %v1564
    %1880 = vmatprep.subr.mxu0 0.0
    %1881 = vmatpush2.msra.mxu0 %v1563
    %1882 = vmatprep.subr.mxu0 0.0
    %1883 = vmatpush2.msra.mxu0 %v1562
    %1884 = vmatprep.mubr.f32.mxu0 %v1797
    %1885 = vmatmul.mubr.f32.gmra.mxu0 %v1796
    %v1886 = vpop.f32.mrf.mxu0
    %v1887 = vadd.f32 %v1807, %v1886
    %v1888 = vpop.f32.mrf.mxu0
    %1889 = vmatprep.mubr.f32.mxu0 %v1800
    %1890 = vmatmul.mubr.f32.gmra.mxu0 %v1799
    %v1891 = vpop.f32.mrf.mxu0
    %v1892 = vadd.f32 %v1812, %v1891
    %v1893 = vpop.f32.mrf.mxu0
    %1894 = vdwg.mxu0
    %1895 = vmatprep.subr.mxu0 0.0
    %1896 = vmatpush1.msra.mxu0 0.0
    %1897 = vmatprep.subr.mxu0 0.0
    %1898 = vmatpush1.msra.mxu0 0.0
    %1899 = vmatprep.subr.mxu0 0.0
    %1900 = vmatpush1.msra.mxu0 0.0
    %1901 = vmatprep.subr.mxu0 0.0
    %1902 = vmatpush1.msra.mxu0 0.0
    %1903 = vmatprep.subr.mxu0 0.0
    %1904 = vmatpush1.msra.mxu0 0.0
    %1905 = vmatprep.subr.mxu0 0.0
    %1906 = vmatpush1.msra.mxu0 0.0
    %1907 = vmatprep.subr.mxu0 0.0
    %1908 = vmatpush1.msra.mxu0 0.0
    %1909 = vmatprep.subr.mxu0 0.0
    %1910 = vmatpush1.msra.mxu0 0.0
    %1911 = vmatprep.subr.mxu0 0.0
    %1912 = vmatpush1.msra.mxu0 %v1795
    %1913 = vmatprep.subr.mxu0 0.0
    %1914 = vmatpush1.msra.mxu0 %v1794
    %1915 = vmatprep.subr.mxu0 0.0
    %1916 = vmatpush1.msra.mxu0 %v1793
    %1917 = vmatprep.subr.mxu0 0.0
    %1918 = vmatpush1.msra.mxu0 %v1792
    %1919 = vmatprep.subr.mxu0 0.0
    %1920 = vmatpush1.msra.mxu0 %v1791
    %1921 = vmatprep.subr.mxu0 0.0
    %1922 = vmatpush1.msra.mxu0 %v1790
    %1923 = vmatprep.subr.mxu0 0.0
    %1924 = vmatpush1.msra.mxu0 %v1789
    %1925 = vmatprep.subr.mxu0 0.0
    %1926 = vmatpush1.msra.mxu0 %v1788
    %1927 = vmatprep.subr.mxu0 0.0
    %1928 = vmatpush2.msra.mxu0 0.0
    %1929 = vmatprep.subr.mxu0 0.0
    %1930 = vmatpush2.msra.mxu0 0.0
    %1931 = vmatprep.subr.mxu0 0.0
    %1932 = vmatpush2.msra.mxu0 0.0
    %1933 = vmatprep.subr.mxu0 0.0
    %1934 = vmatpush2.msra.mxu0 0.0
    %1935 = vmatprep.subr.mxu0 0.0
    %1936 = vmatpush2.msra.mxu0 0.0
    %1937 = vmatprep.subr.mxu0 0.0
    %1938 = vmatpush2.msra.mxu0 0.0
    %1939 = vmatprep.subr.mxu0 0.0
    %1940 = vmatpush2.msra.mxu0 0.0
    %1941 = vmatprep.subr.mxu0 0.0
    %1942 = vmatpush2.msra.mxu0 0.0
    %1943 = vmatprep.subr.mxu0 0.0
    %1944 = vmatpush2.msra.mxu0 0.0
    %1945 = vmatprep.subr.mxu0 0.0
    %1946 = vmatpush2.msra.mxu0 0.0
    %1947 = vmatprep.subr.mxu0 0.0
    %1948 = vmatpush2.msra.mxu0 0.0
    %1949 = vmatprep.subr.mxu0 0.0
    %1950 = vmatpush2.msra.mxu0 0.0
    %1951 = vmatprep.subr.mxu0 0.0
    %1952 = vmatpush2.msra.mxu0 0.0
    %1953 = vmatprep.subr.mxu0 0.0
    %1954 = vmatpush2.msra.mxu0 0.0
    %1955 = vmatprep.subr.mxu0 0.0
    %1956 = vmatpush2.msra.mxu0 0.0
    %1957 = vmatprep.subr.mxu0 0.0
    %1958 = vmatpush2.msra.mxu0 0.0
    %1959 = vmatprep.mubr.f32.mxu0 0.0
    %1960 = vmatmul.mubr.f32.gmra.mxu0 %v1815
    %v1961 = vpop.f32.mrf.mxu0
    %v1962 = vadd.f32 %v1887, %v1961
    %v1963 = vpop.f32.mrf.mxu0
    %1964 = vmatprep.mubr.f32.mxu0 0.0
    %1965 = vmatmul.mubr.f32.gmra.mxu0 %v1818
    %v1966 = vpop.f32.mrf.mxu0
    %v1967 = vadd.f32 %v1892, %v1966
    %v1968 = vpop.f32.mrf.mxu0
    %1969 = vdwg.mxu0
    %v1970 = vmax.f32 %v1962, 0.0
    %v1971 = vmax.f32 %v1967, 0.0
    %1972 = vst [vmem:[#allocation2] sm:$0xff] %v1970
    %1973 = vst [vmem:[#allocation2 + $0x8] sm:$0xff] %v1971
    // Predicated region
    $region38: #{ignnk_forward.1} parent=1 // pred_check
      _
    $region39: #{ignnk_forward.1} parent=1 // pred_check_branch
      %1975 = sbr.rel (0) target = $region41
    $region40: #{ignnk_forward.1} parent=1 // pred_region
      %s1977 = ssub.s32 256, 256
      %1978 = vsyncadd [#allocation3], %s1977
      %s1979 = sshll.u32 [#allocation2], 4
      %s1980 = int_to_ptr.vmem [resolvable:$true] %s1979
      %1985 = dma.vmem_to_hbm [thread:$0]  %s1980, 256, %s9, [#allocation3], 128, 128, 8
    $region41: #{ignnk_forward.1} parent=1 // pred_fallthru
      _
    // Predicated region
    $region42: #{ignnk_forward.1} parent=1 // pred_check
      _
    $region43: #{ignnk_forward.1} parent=1 // pred_check_branch
      %1987 = sbr.rel (0) target = $region45
    $region44: #{ignnk_forward.1} parent=1 // pred_region
      %1988 = dma.done [#allocation3], 256
    $region45: #{ignnk_forward.1} parent=1 // pred_fallthru
      _
    %1989 = vsyncpa [#allocation3], 1

</llo_original>
